<compile_context>
chip_gen: v7x
topology: tpu7x:2x2x1
jax: 0.10.0
libtpu: 0.0.40
codegen_flags: <defaults>
</compile_context>

<pallas_src>
import jax
import jax.numpy as jnp
from jax.experimental import pallas as pl
from jax.experimental.pallas import tpu as pltpu


def _resclassifier_kernel(x_ref, w1_ref, b1_ref, w2_ref, b2_ref, o_ref, acc_ref):
    k = pl.program_id(1)

    @pl.when(k == 0)
    def _():
        acc_ref[...] = jnp.zeros_like(acc_ref)

    # linear1 partial product for this K tile (bf16 inputs, f32 accumulate on MXU)
    acc_ref[...] += jnp.dot(x_ref[...], w1_ref[...],
                            preferred_element_type=jnp.float32)

    @pl.when(k == pl.num_programs(1) - 1)
    def _():
        # bias + relu in f32; BN already folded into w2/b2; dropout = identity (eval)
        h = jnp.maximum(acc_ref[...] + b1_ref[...], 0.0)
        out = jnp.dot(h.astype(w2_ref.dtype), w2_ref[...],
                      preferred_element_type=jnp.float32) + b2_ref[...]
        o_ref[...] = out.astype(o_ref.dtype)


def _round_up(a, m):
    return (a + m - 1) // m * m


def res_classifier_forward(x, params, *, tk=512):
    """x: (B, C, H, W) float32.  Returns (B, num_classes) float32 (eval-mode forward)."""
    w1, b1, gamma, beta, run_mean, run_var, w2, b2 = params
    eps = 1e-5

    B = x.shape[0]
    x_flat = x.reshape(B, -1)                     # glue reshape (torch .view)
    in_feat = x_flat.shape[1]
    width = w1.shape[1]
    num_classes = w2.shape[1]

    # ---- fold BatchNorm1d (eval) into linear2 at trace time --------------------------
    scale = gamma / jnp.sqrt(run_var + eps)       # (width,)
    shift = beta - run_mean * scale               # (width,)
    w2_eff = w2 * scale[:, None]                  # (width, num_classes)
    b2_eff = b2 + shift @ w2                      # (num_classes,)

    # ---- TPU-friendly padded shapes / tile sizes --------------------------------------
    tm = 128 if B >= 128 else _round_up(B, 8)     # M tile (multiple of 8 sublanes)
    tk = min(tk, _round_up(in_feat, 128))         # K tile (multiple of 128 lanes)
    B_pad = _round_up(B, tm)
    K_pad = _round_up(in_feat, tk)
    W_pad = _round_up(width, 128)
    N_pad = _round_up(num_classes, 128)           # lane-dense output

    # bf16 streams (halve HBM traffic); biases stay f32 and are added post-accumulation.
    x_p = jnp.zeros((B_pad, K_pad), jnp.bfloat16).at[:B, :in_feat].set(
        x_flat.astype(jnp.bfloat16))
    w1_p = jnp.zeros((K_pad, W_pad), jnp.bfloat16).at[:in_feat, :width].set(
        w1.astype(jnp.bfloat16))
    b1_p = jnp.zeros((1, W_pad), jnp.float32).at[:, :width].set(b1.reshape(1, width))
    w2_p = jnp.zeros((W_pad, N_pad), jnp.bfloat16).at[:width, :num_classes].set(
        w2_eff.astype(jnp.bfloat16))
    b2_p = jnp.zeros((1, N_pad), jnp.float32).at[:, :num_classes].set(
        b2_eff.reshape(1, num_classes))

    grid = (B_pad // tm, K_pad // tk)

    # VMEM budget estimate (double-buffered inputs) -> explicit limit with headroom,
    # capped below v7x physical (64 MiB per TensorCore).
    est_vmem = (2 * tm * tk * 2            # x tiles (bf16, 2 bufs)
                + 2 * tk * W_pad * 2       # w1 tiles (bf16, 2 bufs)
                + 2 * W_pad * N_pad * 2    # w2 (resident, counted conservatively)
                + tm * W_pad * 4           # f32 accumulator scratch
                + 2 * tm * N_pad * 4       # output tile
                + 4 * (W_pad + N_pad) * 4)  # biases
    vmem_limit = int(min(max(2 * est_vmem, 32 * 1024 * 1024), 48 * 1024 * 1024))

    cost = pl.CostEstimate(
        flops=2 * B_pad * K_pad * W_pad + 2 * B_pad * W_pad * N_pad,
        transcendentals=0,
        bytes_accessed=(x_p.size * 2 + w1_p.size * 2 + w2_p.size * 2
                        + b1_p.size * 4 + b2_p.size * 4 + B_pad * N_pad * 4),
    )

    out_pad = pl.pallas_call(
        _resclassifier_kernel,
        out_shape=jax.ShapeDtypeStruct((B_pad, N_pad), jnp.float32),
        grid=grid,
        in_specs=[
            pl.BlockSpec((tm, tk), lambda i, k: (i, k)),        # x
            pl.BlockSpec((tk, W_pad), lambda i, k: (k, 0)),     # w1
            pl.BlockSpec((1, W_pad), lambda i, k: (0, 0)),      # b1
            pl.BlockSpec((W_pad, N_pad), lambda i, k: (0, 0)),  # w2 (BN folded)
            pl.BlockSpec((1, N_pad), lambda i, k: (0, 0)),      # b2 (BN folded)
        ],
        out_specs=pl.BlockSpec((tm, N_pad), lambda i, k: (i, 0)),
        scratch_shapes=[pltpu.VMEM((tm, W_pad), jnp.float32)],
        compiler_params=pltpu.CompilerParams(
            dimension_semantics=("parallel", "arbitrary"),
            vmem_limit_bytes=vmem_limit),
        cost_estimate=cost,
    )(x_p, w1_p, b1_p, w2_p, b2_p)

    return out_pad[:B, :num_classes]


def init_params(key, in_features, width, num_classes):
    """Deterministic init mimicking PyTorch nn.Linear default (uniform +-1/sqrt(fan_in))."""
    k1, k2, k3, k4 = jax.random.split(key, 4)
    bound1 = 1.0 / jnp.sqrt(in_features)
    bound2 = 1.0 / jnp.sqrt(width)
    w1 = jax.random.uniform(k1, (in_features, width), jnp.float32, -bound1, bound1)
    b1 = jax.random.uniform(k2, (width,), jnp.float32, -bound1, bound1)
    w2 = jax.random.uniform(k3, (width, num_classes), jnp.float32, -bound2, bound2)
    b2 = jax.random.uniform(k4, (num_classes,), jnp.float32, -bound2, bound2)
    # BatchNorm1d defaults
    gamma = jnp.ones((width,), jnp.float32)
    beta = jnp.zeros((width,), jnp.float32)
    run_mean = jnp.zeros((width,), jnp.float32)
    run_var = jnp.ones((width,), jnp.float32)
    return (w1, b1, gamma, beta, run_mean, run_var, w2, b2)


if __name__ == "__main__":
    # Small shapes consistent with the module: x (B, C, H, W) flattened to in_channels.
    B, C, H, W = 2, 4, 16, 16
    in_features = C * H * W          # 1024
    width = 512                      # module default
    num_classes = 10

    key = jax.random.PRNGKey(0)
    kx, kp = jax.random.split(key)
    x = jax.random.normal(kx, (B, C, H, W), jnp.float32)
    params = init_params(kp, in_features, width, num_classes)

    out = jax.block_until_ready(res_classifier_forward(x, params))

    # Sanity check against a plain-JAX f32 reference of the same (eval-mode) math.
    x_flat = x.reshape(B, -1)
    w1, b1, gamma, beta, rm, rv, w2, b2 = params
    h = jnp.maximum(x_flat @ w1 + b1, 0.0)
    h = (h - rm) / jnp.sqrt(rv + 1e-5) * gamma + beta
    ref = h @ w2 + b2

    assert out.shape == (B, num_classes)
    assert bool(jnp.all(jnp.isfinite(out)))
    # Loosened tolerance: kernel runs weights/activations in bf16 (f32 accumulation).
    assert jnp.allclose(out, ref, atol=5e-2, rtol=5e-2), float(jnp.max(jnp.abs(out - ref)))

    print("KERNEL_OK")
</pallas_src>

<mosaic_0001>
module attributes {stable_mosaic.version = 11 : i64} {
  func.func @_resclassifier_kernel(%arg0: i32, %arg1: i32, %arg2: memref<8x512xbf16, #tpu.memory_space<vmem>>, %arg3: memref<512x512xbf16, #tpu.memory_space<vmem>>, %arg4: memref<1x512xf32, #tpu.memory_space<vmem>>, %arg5: memref<512x128xbf16, #tpu.memory_space<vmem>>, %arg6: memref<1x128xf32, #tpu.memory_space<vmem>>, %arg7: memref<8x128xf32, #tpu.memory_space<vmem>>, %arg8: memref<8x512xf32, #tpu.memory_space<vmem>>) attributes {dimension_semantics = [#tpu.dimension_semantics<parallel>, #tpu.dimension_semantics<arbitrary>], iteration_bounds = array<i64: 1, 2>, scalar_prefetch = 0 : i64, scratch_operands = 1 : i64, tpu.core_type = #tpu.core_type<tc>, window_params = [{transform_indices = @transform_0, window_bounds = array<i64: 8, 512>}, {transform_indices = @transform_1, window_bounds = array<i64: 512, 512>}, {pipeline_mode = #tpu.pipeline_mode<synchronous>, transform_indices = @transform_2, window_bounds = array<i64: 1, 512>}, {pipeline_mode = #tpu.pipeline_mode<synchronous>, transform_indices = @transform_3, window_bounds = array<i64: 512, 128>}, {pipeline_mode = #tpu.pipeline_mode<synchronous>, transform_indices = @transform_4, window_bounds = array<i64: 1, 128>}, {transform_indices = @transform_5, window_bounds = array<i64: 8, 128>}]} {
    %c0_i32 = arith.constant 0 : i32
    %0 = arith.cmpi eq, %arg1, %c0_i32 : i32
    %1 = arith.extui %0 : i1 to i32
    %c0_i32_0 = arith.constant 0 : i32
    %2 = arith.cmpi ne, %1, %c0_i32_0 : i32
    scf.if %2 {
      %cst_9 = arith.constant 0.000000e+00 : f32
      %12 = vector.broadcast %cst_9 : f32 to vector<8x512xf32>
      %c0_10 = arith.constant 0 : index
      %c0_11 = arith.constant 0 : index
      %13 = vector.load %arg8[%c0_10, %c0_11] : memref<8x512xf32, #tpu.memory_space<vmem>>, vector<8x512xf32>
      tpu.vector_store %arg8[%c0_10, %c0_11], %12 {strides = array<i32>} : memref<8x512xf32, #tpu.memory_space<vmem>>, vector<8x512xf32>,
    } else {
    }
    %c0 = arith.constant 0 : index
    %c0_1 = arith.constant 0 : index
    %3 = vector.load %arg8[%c0, %c0_1] : memref<8x512xf32, #tpu.memory_space<vmem>>, vector<8x512xf32>
    %c0_2 = arith.constant 0 : index
    %c0_3 = arith.constant 0 : index
    %4 = vector.load %arg2[%c0_2, %c0_3] : memref<8x512xbf16, #tpu.memory_space<vmem>>, vector<8x512xbf16>
    %c0_4 = arith.constant 0 : index
    %c0_5 = arith.constant 0 : index
    %5 = vector.load %arg3[%c0_4, %c0_5] : memref<512x512xbf16, #tpu.memory_space<vmem>>, vector<512x512xbf16>
    %cst = arith.constant dense<0.000000e+00> : vector<8x512xf32>
    %6 = tpu.matmul %4, %5, %cst {dimension_numbers = #tpu.dot_dimension_numbers<[1], [0], [0], [1], [0, 0, 1, 1], [], []>} : vector<8x512xbf16>, vector<512x512xbf16>, vector<8x512xf32> -> vector<8x512xf32>
    %7 = arith.addf %3, %6 : vector<8x512xf32>
    %c0_6 = arith.constant 0 : index
    %c0_7 = arith.constant 0 : index
    %8 = vector.load %arg8[%c0_6, %c0_7] : memref<8x512xf32, #tpu.memory_space<vmem>>, vector<8x512xf32>
    tpu.vector_store %arg8[%c0_6, %c0_7], %7 {strides = array<i32>} : memref<8x512xf32, #tpu.memory_space<vmem>>, vector<8x512xf32>,
    %c1_i32 = arith.constant 1 : i32
    %9 = arith.cmpi eq, %arg1, %c1_i32 : i32
    %10 = arith.extui %9 : i1 to i32
    %c0_i32_8 = arith.constant 0 : i32
    %11 = arith.cmpi ne, %10, %c0_i32_8 : i32
    scf.if %11 {
      %c0_9 = arith.constant 0 : index
      %c0_10 = arith.constant 0 : index
      %12 = vector.load %arg8[%c0_9, %c0_10] : memref<8x512xf32, #tpu.memory_space<vmem>>, vector<8x512xf32>
      %c0_11 = arith.constant 0 : index
      %c0_12 = arith.constant 0 : index
      %13 = vector.load %arg4[%c0_11, %c0_12] : memref<1x512xf32, #tpu.memory_space<vmem>>, vector<1x512xf32>
      %14 = vector.broadcast %13 : vector<1x512xf32> to vector<8x512xf32>
      %15 = arith.addf %12, %14 : vector<8x512xf32>
      %cst_13 = arith.constant 0.000000e+00 : f32
      %16 = vector.broadcast %cst_13 : f32 to vector<8x512xf32>
      %17 = arith.maximumf %15, %16 : vector<8x512xf32>
      %18 = arith.truncf %17 : vector<8x512xf32> to vector<8x512xbf16>
      %c0_14 = arith.constant 0 : index
      %c0_15 = arith.constant 0 : index
      %19 = vector.load %arg5[%c0_14, %c0_15] : memref<512x128xbf16, #tpu.memory_space<vmem>>, vector<512x128xbf16>
      %cst_16 = arith.constant dense<0.000000e+00> : vector<8x128xf32>
      %20 = tpu.matmul %18, %19, %cst_16 {dimension_numbers = #tpu.dot_dimension_numbers<[1], [0], [0], [1], [0, 0, 1, 1], [], []>} : vector<8x512xbf16>, vector<512x128xbf16>, vector<8x128xf32> -> vector<8x128xf32>
      %c0_17 = arith.constant 0 : index
      %c0_18 = arith.constant 0 : index
      %21 = vector.load %arg6[%c0_17, %c0_18] : memref<1x128xf32, #tpu.memory_space<vmem>>, vector<1x128xf32>
      %22 = vector.broadcast %21 : vector<1x128xf32> to vector<8x128xf32>
      %23 = arith.addf %20, %22 : vector<8x128xf32>
      %c0_19 = arith.constant 0 : index
      %c0_20 = arith.constant 0 : index
      %24 = vector.load %arg7[%c0_19, %c0_20] : memref<8x128xf32, #tpu.memory_space<vmem>>, vector<8x128xf32>
      tpu.vector_store %arg7[%c0_19, %c0_20], %23 {strides = array<i32>} : memref<8x128xf32, #tpu.memory_space<vmem>>, vector<8x128xf32>,
    } else {
    }
    return
  }
  func.func @transform_0(%arg0: i32, %arg1: i32) -> (i32, i32) {
    %c0_i32 = arith.constant 0 : i32
    return %arg0, %arg1 : i32, i32
  }
  func.func @transform_1(%arg0: i32, %arg1: i32) -> (i32, i32) {
    %c0_i32 = arith.constant 0 : i32
    %c0_i32_0 = arith.constant 0 : i32
    return %arg1, %c0_i32 : i32, i32
  }
  func.func @transform_2(%arg0: i32, %arg1: i32) -> (i32, i32) {
    %c0_i32 = arith.constant 0 : i32
    %c0_i32_0 = arith.constant 0 : i32
    %c0_i32_1 = arith.constant 0 : i32
    return %c0_i32, %c0_i32_0 : i32, i32
  }
  func.func @transform_3(%arg0: i32, %arg1: i32) -> (i32, i32) {
    %c0_i32 = arith.constant 0 : i32
    %c0_i32_0 = arith.constant 0 : i32
    %c0_i32_1 = arith.constant 0 : i32
    return %c0_i32, %c0_i32_0 : i32, i32
  }
  func.func @transform_4(%arg0: i32, %arg1: i32) -> (i32, i32) {
    %c0_i32 = arith.constant 0 : i32
    %c0_i32_0 = arith.constant 0 : i32
    %c0_i32_1 = arith.constant 0 : i32
    return %c0_i32, %c0_i32_0 : i32, i32
  }
  func.func @transform_5(%arg0: i32, %arg1: i32) -> (i32, i32) {
    %c0_i32 = arith.constant 0 : i32
    %c0_i32_0 = arith.constant 0 : i32
    return %arg0, %c0_i32 : i32, i32
  }
}

</mosaic_0001>

<llo_original>
// kernel: tpu_custom_call.1
$region0: #{tpu_custom_call.1}
  #allocation0 [shape = 'u32[]', space=smem, size = 0x4, offset = 0x4, fixed_abs, tag = 'smem constant byte address 0x4 - core index']
  #allocation1 [shape = 'u32[144,128]{1,0:T(1,128)}', space=vmem, size = 0x12000, scoped, tag = 'internal scratch']
  #allocation2 [shape = 'f32[8,512]{1,0:T(8,128)}', space=vmem, size = 0x4000, scoped, tag = 'scratch operand']
  %s0 = inlined_call_operand.hbm [shape: bf16[8,1024], index: 0, kind: input, shape index: {}]
  %s1 = inlined_call_operand.hbm [shape: bf16[1024,512], index: 1, kind: input, shape index: {}]
  %s2 = inlined_call_operand.vmem [shape: f32[1,512], index: 2, kind: input, shape index: {}]
  %s3 = inlined_call_operand.hbm [shape: bf16[512,128], index: 3, kind: input, shape index: {}]
  %s4 = inlined_call_operand.vmem [shape: f32[1,128], index: 4, kind: input, shape index: {}]
  %s5 = inlined_call_operand.hbm [shape: f32[8,128], index: 5, kind: output, shape index: {}]
  %s6 = sld [smem:[#allocation0]]
  $region73: #{tpu_custom_call.1} parent=0
    _
  %s8 = ssub.s32 1, %s6
  %s9 = scalar_select 0, %s8, %s6
  $region1: #{tpu_custom_call.1} parent=0
    #allocation3 [shape = 'u8[16384]{0}', space=vmem, size = 0x4000, scoped, tag = 'input window, operand 0']
    #allocation4 [shape = 's32[2]{0}', space=sflag, size = 0x8, scoped, tag = 'scoped memory for tpu_custom_call.1']
    #allocation5 [shape = 's32[2]{0}', space=sflag, size = 0x8, scoped, tag = 'scoped memory for tpu_custom_call.1']
    #allocation6 [shape = 'u8[1048576]{0}', space=vmem, size = 0x100000, scoped, tag = 'input window, operand 1']
    #allocation7 [shape = 's32[2]{0}', space=sflag, size = 0x8, scoped, tag = 'scoped memory for tpu_custom_call.1']
    #allocation8 [shape = 'u8[131072]{0}', space=vmem, size = 0x20000, scoped, tag = 'input window, operand 3, single buffered']
    #allocation9 [shape = 'u8[4096]{0}', space=vmem, size = 0x1000, scoped, tag = 'output window, operand 0, single buffered']
    %10 = vsyncpa [#allocation4], 0
    %s11 = scalar_lea.sflag [#allocation4], 1
    %12 = vsyncpa %s11, 0
    %13 = vsyncpa [#allocation7], 0
    %s14 = scalar_lea.sflag [#allocation7], 1
    %15 = vsyncpa %s14, 0
    %16 = vsyncpa [#allocation5], 0
    loop: start=0, step=1, limit=4
    $region2: #{tpu_custom_call.1} parent=1 // loop_pre_header
      _
    $region3: #{tpu_custom_call.1} parent=1 // loop_header
      %s18 = sphi 0, %s22
      %p19 = scmp.ge.s32.totalorder %s18, 4
      %s25 = sphi 0, %s37
      %s26 = sphi 0, %s33
      %s27 = sphi 0, %s25
      %s28 = sphi 0, %s26
      %s29 = sphi 0, %s27
      %s30 = sphi 0, %s28
      %s42 = sphi 0, %s44
      %s45 = sphi 0, %s42
      %s46 = sphi 0, %s45
      %s62 = sphi 0, %s46
      %s68 = sphi 0, %s70
      %s71 = sphi 0, %s68
      %s72 = sphi 0, %s71
      %s88 = sphi 0, %s72
      %s92 = sphi 0, %s92
      %s94 = sphi 0, %s92
      %s95 = sphi 0, %s94
      %s109 = sphi 0, %s95
      %s113 = sphi 0, %s113
      %s115 = sphi 0, %s113
      %s116 = sphi 0, %s115
      %s130 = sphi 0, %s116
      %s134 = sphi 0, %s134
      %s136 = sphi 0, %s134
      %s137 = sphi 0, %s136
      %s151 = sphi 0, %s137
      %s157 = sphi 0, %s159
      %s160 = sphi 0, %s157
      %s161 = sphi 0, %s160
      %s177 = sphi 0, %s161
    $region4: #{tpu_custom_call.1} parent=1 // loop_header_branch
      %21 = sbr.rel (%p19) target = $region8
    $region5: #{tpu_custom_call.1} parent=1 // loop_body
      %s23 = ssub.s32 %s18, 1
      %s24 = ssub.s32 %s18, 2
      %s31 = sadd.s32 1, %s26
      %p32 = scmp.ge.s32.totalorder %s31, 2
      %s33 = scalar_select %p32, 0, %s31
      %s34 = sadd.s32 1, %s25
      %s35 = scalar_select %p32, %s34, %s25
      %p36 = scmp.ge.s32.totalorder %s35, 1
      %s37 = scalar_select %p36, 0, %s35
      %s38 = ssub.s32 %s25, %s37
      %s39 = ssub.s32 %s26, %s33
      %s40 = sor.u32 %s38, %s39
      %p41 = scmp.eq.s32.totalorder %s40, 0
      %s43 = sadd.s32 %s42, 1
      %s44 = scalar_select %p41, %s42, %s43
      %p47 = pneg %p41
      %p48 = scmp.eq.s32.totalorder %s18, 1
      %p49 = por %p47, %p48
      %p50 = scmp.ne.s32.totalorder %s42, %s45
      %p51 = scmp.eq.s32.totalorder %s18, 0
      %p52 = por %p50, %p51
      %p53 = scmp.ne.s32.totalorder %s42, %s45
      %p54 = scmp.eq.s32.totalorder %s23, 1
      %p55 = por %p53, %p54
      %p56 = scmp.ne.s32.totalorder %s45, %s46
      %p57 = scmp.eq.s32.totalorder %s23, 0
      %p58 = por %p56, %p57
      %p59 = scmp.ne.s32.totalorder %s45, %s46
      %p60 = scmp.eq.s32.totalorder %s24, 1
      %p61 = por %p59, %p60
      %p63 = scmp.ne.s32.totalorder %s46, %s62
      %p64 = scmp.eq.s32.totalorder %s24, 0
      %p65 = por %p63, %p64
      %s66 = ssub.s32 %s26, %s33
      %p67 = scmp.eq.s32.totalorder %s66, 0
      %s69 = sadd.s32 %s68, 1
      %s70 = scalar_select %p67, %s68, %s69
      %p73 = pneg %p67
      %p74 = scmp.eq.s32.totalorder %s18, 1
      %p75 = por %p73, %p74
      %p76 = scmp.ne.s32.totalorder %s68, %s71
      %p77 = scmp.eq.s32.totalorder %s18, 0
      %p78 = por %p76, %p77
      %p79 = scmp.ne.s32.totalorder %s68, %s71
      %p80 = scmp.eq.s32.totalorder %s23, 1
      %p81 = por %p79, %p80
      %p82 = scmp.ne.s32.totalorder %s71, %s72
      %p83 = scmp.eq.s32.totalorder %s23, 0
      %p84 = por %p82, %p83
      %p85 = scmp.ne.s32.totalorder %s71, %s72
      %p86 = scmp.eq.s32.totalorder %s24, 1
      %p87 = por %p85, %p86
      %p89 = scmp.ne.s32.totalorder %s72, %s88
      %p90 = scmp.eq.s32.totalorder %s24, 0
      %p91 = por %p89, %p90
      %s93 = sadd.s32 %s92, 1
      %p96 = scmp.eq.s32.totalorder %s18, 1
      %p97 = scmp.ne.s32.totalorder %s92, %s94
      %p98 = scmp.eq.s32.totalorder %s18, 0
      %p99 = por %p97, %p98
      %p100 = scmp.ne.s32.totalorder %s92, %s94
      %p101 = scmp.eq.s32.totalorder %s23, 1
      %p102 = por %p100, %p101
      %p103 = scmp.ne.s32.totalorder %s94, %s95
      %p104 = scmp.eq.s32.totalorder %s23, 0
      %p105 = por %p103, %p104
      %p106 = scmp.ne.s32.totalorder %s94, %s95
      %p107 = scmp.eq.s32.totalorder %s24, 1
      %p108 = por %p106, %p107
      %p110 = scmp.ne.s32.totalorder %s95, %s109
      %p111 = scmp.eq.s32.totalorder %s24, 0
      %p112 = por %p110, %p111
      %s114 = sadd.s32 %s113, 1
      %p117 = scmp.eq.s32.totalorder %s18, 1
      %p118 = scmp.ne.s32.totalorder %s113, %s115
      %p119 = scmp.eq.s32.totalorder %s18, 0
      %p120 = por %p118, %p119
      %p121 = scmp.ne.s32.totalorder %s113, %s115
      %p122 = scmp.eq.s32.totalorder %s23, 1
      %p123 = por %p121, %p122
      %p124 = scmp.ne.s32.totalorder %s115, %s116
      %p125 = scmp.eq.s32.totalorder %s23, 0
      %p126 = por %p124, %p125
      %p127 = scmp.ne.s32.totalorder %s115, %s116
      %p128 = scmp.eq.s32.totalorder %s24, 1
      %p129 = por %p127, %p128
      %p131 = scmp.ne.s32.totalorder %s116, %s130
      %p132 = scmp.eq.s32.totalorder %s24, 0
      %p133 = por %p131, %p132
      %s135 = sadd.s32 %s134, 1
      %p138 = scmp.eq.s32.totalorder %s18, 1
      %p139 = scmp.ne.s32.totalorder %s134, %s136
      %p140 = scmp.eq.s32.totalorder %s18, 0
      %p141 = por %p139, %p140
      %p142 = scmp.ne.s32.totalorder %s134, %s136
      %p143 = scmp.eq.s32.totalorder %s23, 1
      %p144 = por %p142, %p143
      %p145 = scmp.ne.s32.totalorder %s136, %s137
      %p146 = scmp.eq.s32.totalorder %s23, 0
      %p147 = por %p145, %p146
      %p148 = scmp.ne.s32.totalorder %s136, %s137
      %p149 = scmp.eq.s32.totalorder %s24, 1
      %p150 = por %p148, %p149
      %p152 = scmp.ne.s32.totalorder %s137, %s151
      %p153 = scmp.eq.s32.totalorder %s24, 0
      %p154 = por %p152, %p153
      %s155 = ssub.s32 %s25, %s37
      %p156 = scmp.eq.s32.totalorder %s155, 0
      %s158 = sadd.s32 %s157, 1
      %s159 = scalar_select %p156, %s157, %s158
      %p162 = pneg %p156
      %p163 = scmp.eq.s32.totalorder %s18, 1
      %p164 = por %p162, %p163
      %p165 = scmp.ne.s32.totalorder %s157, %s160
      %p166 = scmp.eq.s32.totalorder %s18, 0
      %p167 = por %p165, %p166
      %p168 = scmp.ne.s32.totalorder %s157, %s160
      %p169 = scmp.eq.s32.totalorder %s23, 1
      %p170 = por %p168, %p169
      %p171 = scmp.ne.s32.totalorder %s160, %s161
      %p172 = scmp.eq.s32.totalorder %s23, 0
      %p173 = por %p171, %p172
      %p174 = scmp.ne.s32.totalorder %s160, %s161
      %p175 = scmp.eq.s32.totalorder %s24, 1
      %p176 = por %p174, %p175
      %p178 = scmp.ne.s32.totalorder %s161, %s177
      %p179 = scmp.eq.s32.totalorder %s24, 0
      %p180 = por %p178, %p179
      %p181 = scmp.le.s32.totalorder 1, %s18
      %p182 = scmp.lt.s32.totalorder %s18, 3
      %p183 = pnand %p181, %p182
      %p184 = pneg %p183
      // Predicated region
      $region9: #{tpu_custom_call.1} parent=5 // pred_check
        _
      $region10: #{tpu_custom_call.1} parent=5 // pred_check_branch
        %186 = sbr.rel (%p183) target = $region12
      $region11: #{tpu_custom_call.1} parent=5 // pred_region
        %s187 = ssub.s32 %s18, 1
        // Predicated region
        $region13: #{tpu_custom_call.1} parent=11 // pred_check
          %p188 = pneg %p105
        $region14: #{tpu_custom_call.1} parent=11 // pred_check_branch
          %190 = sbr.rel (%p188) target = $region16
        $region15: #{tpu_custom_call.1} parent=11 // pred_region
          _
        $region16: #{tpu_custom_call.1} parent=11 // pred_fallthru
          _
        // Predicated region
        $region17: #{tpu_custom_call.1} parent=11 // pred_check
          %p191 = pneg %p126
        $region18: #{tpu_custom_call.1} parent=11 // pred_check_branch
          %193 = sbr.rel (%p191) target = $region20
        $region19: #{tpu_custom_call.1} parent=11 // pred_region
          %s195 = ssub.s32 4096, 4096
          %196 = vsyncadd [#allocation7], %s195
          %s197 = sshll.u32 [#allocation8], 4
          %s198 = int_to_ptr.vmem [resolvable:$true] %s197
          %203 = dma.hbm_to_vmem [thread:$0]  %s3, 4096, %s198, [#allocation7], 64, 64, 4
        $region20: #{tpu_custom_call.1} parent=11 // pred_fallthru
          _
        // Predicated region
        $region21: #{tpu_custom_call.1} parent=11 // pred_check
          %p204 = pneg %p147
        $region22: #{tpu_custom_call.1} parent=11 // pred_check_branch
          %206 = sbr.rel (%p204) target = $region24
        $region23: #{tpu_custom_call.1} parent=11 // pred_region
          _
        $region24: #{tpu_custom_call.1} parent=11 // pred_fallthru
          _
      $region12: #{tpu_custom_call.1} parent=5 // pred_fallthru
        _
      %p207 = scmp.lt.s32.totalorder %s18, 2
      // Predicated region
      $region25: #{tpu_custom_call.1} parent=5 // pred_check
        %p208 = pneg %p207
      $region26: #{tpu_custom_call.1} parent=5 // pred_check_branch
        %210 = sbr.rel (%p208) target = $region28
      $region27: #{tpu_custom_call.1} parent=5 // pred_region
        // Predicated region
        $region29: #{tpu_custom_call.1} parent=27 // pred_check
          %p211 = pneg %p52
        $region30: #{tpu_custom_call.1} parent=27 // pred_check_branch
          %213 = sbr.rel (%p211) target = $region32
        $region31: #{tpu_custom_call.1} parent=27 // pred_region
          %s214 = sand.u32 %s42, 1
          %s215 = scalar_lea.sflag [#allocation4], %s214
          %s216 = sand.u32 %s42, 1
          %s217 = smul.addr %s216, 16
          %s218 = scalar_lea.vmem [#allocation3], %s217
          %s219 = smul.u32 4, %s26
          %s221 = ssub.s32 256, 256
          %222 = vsyncadd %s215, %s221
          %s223 = smul.addr %s25, 8
          %s224 = sadd.s32 %s219, %s223
          %s225 = smul.addr %s224, 64
          %s226 = scalar_lea.hbm %s0, %s225
          %s228 = sshll.u32 %s218, 4
          %s229 = int_to_ptr.vmem [resolvable:$true] %s228
          %231 = dma.hbm_to_vmem [thread:$0]  %s226, 256, %s229, %s215
        $region32: #{tpu_custom_call.1} parent=27 // pred_fallthru
          _
        // Predicated region
        $region33: #{tpu_custom_call.1} parent=27 // pred_check
          %p232 = pneg %p78
        $region34: #{tpu_custom_call.1} parent=27 // pred_check_branch
          %234 = sbr.rel (%p232) target = $region36
        $region35: #{tpu_custom_call.1} parent=27 // pred_region
          %s235 = sand.u32 %s18, 1
          %s236 = scalar_lea.sflag [#allocation7], %s235
          %s237 = sand.u32 %s68, 1
          %s238 = smul.addr %s237, 1024
          %s239 = scalar_lea.vmem [#allocation6], %s238
          %s240 = smul.u32 64, %s26
          %s242 = ssub.s32 16384, 16384
          %243 = vsyncadd %s236, %s242
          %s244 = smul.addr %s240, 4
          %s245 = smul.addr %s244, 64
          %s246 = scalar_lea.hbm %s1, %s245
          %s247 = sshll.u32 %s239, 4
          %s248 = int_to_ptr.vmem [resolvable:$true] %s247
          %253 = dma.hbm_to_vmem [thread:$0]  %s246, 16384, %s248, %s236, 256, 256, 16
        $region36: #{tpu_custom_call.1} parent=27 // pred_fallthru
          _
      $region28: #{tpu_custom_call.1} parent=5 // pred_fallthru
        _
      %p254 = scmp.le.s32.totalorder 1, %s18
      %p255 = scmp.lt.s32.totalorder %s18, 3
      %p256 = pnand %p254, %p255
      %p257 = pneg %p256
      // Predicated region
      $region37: #{tpu_custom_call.1} parent=5 // pred_check
        _
      $region38: #{tpu_custom_call.1} parent=5 // pred_check_branch
        %259 = sbr.rel (%p256) target = $region40
      $region39: #{tpu_custom_call.1} parent=5 // pred_region
        %s260 = ssub.s32 %s18, 1
        %s261 = sand.u32 %s45, 1
        %s262 = scalar_lea.sflag [#allocation4], %s261
        %s263 = sand.u32 %s45, 1
        %s264 = smul.addr %s263, 16
        %s265 = scalar_lea.vmem [#allocation3], %s264
        // Predicated region
        $region41: #{tpu_custom_call.1} parent=39 // pred_check
          %p266 = pneg %p58
        $region42: #{tpu_custom_call.1} parent=39 // pred_check_branch
          %268 = sbr.rel (%p266) target = $region44
        $region43: #{tpu_custom_call.1} parent=39 // pred_region
          %269 = dma.done %s262, 256
        $region44: #{tpu_custom_call.1} parent=39 // pred_fallthru
          _
        %s270 = sand.u32 %s23, 1
        %s271 = scalar_lea.sflag [#allocation7], %s270
        %s272 = sand.u32 %s71, 1
        %s273 = smul.addr %s272, 1024
        %s274 = scalar_lea.vmem [#allocation6], %s273
        // Predicated region
        $region45: #{tpu_custom_call.1} parent=39 // pred_check
          %p275 = pneg %p84
        $region46: #{tpu_custom_call.1} parent=39 // pred_check_branch
          %277 = sbr.rel (%p275) target = $region48
        $region47: #{tpu_custom_call.1} parent=39 // pred_region
          %278 = dma.done %s271, 16384
        $region48: #{tpu_custom_call.1} parent=39 // pred_fallthru
          _
        // Predicated region
        $region49: #{tpu_custom_call.1} parent=39 // pred_check
          %p279 = pneg %p126
        $region50: #{tpu_custom_call.1} parent=39 // pred_check_branch
          %281 = sbr.rel (%p279) target = $region52
        $region51: #{tpu_custom_call.1} parent=39 // pred_region
          %282 = dma.done [#allocation7], 4096
        $region52: #{tpu_custom_call.1} parent=39 // pred_fallthru
          _
        %s283 = sand.u32 %s45, 1
        %s284 = scalar_lea.sflag [#allocation4], %s283
        %s285 = sand.u32 %s45, 1
        %s286 = smul.addr %s285, 16
        %s287 = scalar_lea.vmem [#allocation3], %s286
        %p288 = pneg %p58
        %p289 = pneg %p55
        %s290 = sand.u32 %s23, 1
        %s291 = scalar_lea.sflag [#allocation7], %s290
        %s292 = sand.u32 %s71, 1
        %s293 = smul.addr %s292, 1024
        %s294 = scalar_lea.vmem [#allocation6], %s293
        %p295 = pneg %p84
        %p296 = pneg %p81
        %p297 = pneg %p105
        %p298 = pneg %p102
        %p299 = pneg %p126
        %p300 = pneg %p123
        %p301 = pneg %p147
        %p302 = pneg %p144
        %p303 = pneg %p173
        %p304 = pneg %p170
        %s305 = smul.u32 4, %s28
        %s306 = smul.u32 64, %s28
        %p308 = scmp.eq.s32.totalorder %s28, 0
        // Predicated region
        $region53: #{tpu_custom_call.1} parent=39 // pred_check
          %p309 = pneg %p308
        $region54: #{tpu_custom_call.1} parent=39 // pred_check_branch
          %311 = sbr.rel (%p309) target = $region56
        $region55: #{tpu_custom_call.1} parent=39 // pred_region
          %312 = vst [vmem:[#allocation2] sm:$0xff] 0.0
          %313 = vst [vmem:[#allocation2 + $0x8] sm:$0xff] 0.0
          %314 = vst [vmem:[#allocation2 + $0x10] sm:$0xff] 0.0
          %315 = vst [vmem:[#allocation2 + $0x18] sm:$0xff] 0.0
        $region56: #{tpu_custom_call.1} parent=39 // pred_fallthru
          _
        %v316 = vld [vmem:[#allocation2] sm:$0xff]
        %v317 = vld [vmem:[#allocation2 + $0x8] sm:$0xff]
        %v318 = vld [vmem:[#allocation2 + $0x10] sm:$0xff]
        %v319 = vld [vmem:[#allocation2 + $0x18] sm:$0xff]
        %v320 = vld [vmem:[%s265] sm:$0xff]
        %v321 = vld [vmem:[%s265 + $0x8] sm:$0xff]
        %v322 = vld [vmem:[%s274] sm:$0xff]
        %v323 = vld [vmem:[%s274 + $0x8] sm:$0xff]
        %v324 = vld [vmem:[%s274 + $0x10] sm:$0xff]
        %v325 = vld [vmem:[%s274 + $0x18] sm:$0xff]
        %v326 = vld [vmem:[%s274 + $0x20] sm:$0xff]
        %v327 = vld [vmem:[%s274 + $0x28] sm:$0xff]
        %v328 = vld [vmem:[%s274 + $0x30] sm:$0xff]
        %v329 = vld [vmem:[%s274 + $0x38] sm:$0xff]
        %v330 = vld [vmem:[%s274 + $0x40] sm:$0xff]
        %v331 = vld [vmem:[%s274 + $0x48] sm:$0xff]
        %v332 = vld [vmem:[%s274 + $0x50] sm:$0xff]
        %v333 = vld [vmem:[%s274 + $0x58] sm:$0xff]
        %v334 = vld [vmem:[%s274 + $0x60] sm:$0xff]
        %v335 = vld [vmem:[%s274 + $0x68] sm:$0xff]
        %v336 = vld [vmem:[%s274 + $0x70] sm:$0xff]
        %v337 = vld [vmem:[%s274 + $0x78] sm:$0xff]
        %v338 = vld [vmem:[%s274 + $0x80] sm:$0xff]
        %v339 = vld [vmem:[%s274 + $0x88] sm:$0xff]
        %v340 = vld [vmem:[%s274 + $0x90] sm:$0xff]
        %v341 = vld [vmem:[%s274 + $0x98] sm:$0xff]
        %v342 = vld [vmem:[%s274 + $0xa0] sm:$0xff]
        %v343 = vld [vmem:[%s274 + $0xa8] sm:$0xff]
        %v344 = vld [vmem:[%s274 + $0xb0] sm:$0xff]
        %v345 = vld [vmem:[%s274 + $0xb8] sm:$0xff]
        %v346 = vld [vmem:[%s274 + $0xc0] sm:$0xff]
        %v347 = vld [vmem:[%s274 + $0xc8] sm:$0xff]
        %v348 = vld [vmem:[%s274 + $0xd0] sm:$0xff]
        %v349 = vld [vmem:[%s274 + $0xd8] sm:$0xff]
        %v350 = vld [vmem:[%s274 + $0xe0] sm:$0xff]
        %v351 = vld [vmem:[%s274 + $0xe8] sm:$0xff]
        %v352 = vld [vmem:[%s274 + $0xf0] sm:$0xff]
        %v353 = vld [vmem:[%s274 + $0xf8] sm:$0xff]
        %v354 = vld [vmem:[%s274 + $0x100] sm:$0xff]
        %v355 = vld [vmem:[%s274 + $0x108] sm:$0xff]
        %v356 = vld [vmem:[%s274 + $0x110] sm:$0xff]
        %v357 = vld [vmem:[%s274 + $0x118] sm:$0xff]
        %v358 = vld [vmem:[%s274 + $0x120] sm:$0xff]
        %v359 = vld [vmem:[%s274 + $0x128] sm:$0xff]
        %v360 = vld [vmem:[%s274 + $0x130] sm:$0xff]
        %v361 = vld [vmem:[%s274 + $0x138] sm:$0xff]
        %v362 = vld [vmem:[%s274 + $0x140] sm:$0xff]
        %v363 = vld [vmem:[%s274 + $0x148] sm:$0xff]
        %v364 = vld [vmem:[%s274 + $0x150] sm:$0xff]
        %v365 = vld [vmem:[%s274 + $0x158] sm:$0xff]
        %v366 = vld [vmem:[%s274 + $0x160] sm:$0xff]
        %v367 = vld [vmem:[%s274 + $0x168] sm:$0xff]
        %v368 = vld [vmem:[%s274 + $0x170] sm:$0xff]
        %v369 = vld [vmem:[%s274 + $0x178] sm:$0xff]
        %v370 = vld [vmem:[%s274 + $0x180] sm:$0xff]
        %v371 = vld [vmem:[%s274 + $0x188] sm:$0xff]
        %v372 = vld [vmem:[%s274 + $0x190] sm:$0xff]
        %v373 = vld [vmem:[%s274 + $0x198] sm:$0xff]
        %v374 = vld [vmem:[%s274 + $0x1a0] sm:$0xff]
        %v375 = vld [vmem:[%s274 + $0x1a8] sm:$0xff]
        %v376 = vld [vmem:[%s274 + $0x1b0] sm:$0xff]
        %v377 = vld [vmem:[%s274 + $0x1b8] sm:$0xff]
        %v378 = vld [vmem:[%s274 + $0x1c0] sm:$0xff]
        %v379 = vld [vmem:[%s274 + $0x1c8] sm:$0xff]
        %v380 = vld [vmem:[%s274 + $0x1d0] sm:$0xff]
        %v381 = vld [vmem:[%s274 + $0x1d8] sm:$0xff]
        %v382 = vld [vmem:[%s274 + $0x1e0] sm:$0xff]
        %v383 = vld [vmem:[%s274 + $0x1e8] sm:$0xff]
        %v384 = vld [vmem:[%s274 + $0x1f0] sm:$0xff]
        %v385 = vld [vmem:[%s274 + $0x1f8] sm:$0xff]
        %v386 = vld [vmem:[%s274 + $0x200] sm:$0xff]
        %v387 = vld [vmem:[%s274 + $0x208] sm:$0xff]
        %v388 = vld [vmem:[%s274 + $0x210] sm:$0xff]
        %v389 = vld [vmem:[%s274 + $0x218] sm:$0xff]
        %v390 = vld [vmem:[%s274 + $0x220] sm:$0xff]
        %v391 = vld [vmem:[%s274 + $0x228] sm:$0xff]
        %v392 = vld [vmem:[%s274 + $0x230] sm:$0xff]
        %v393 = vld [vmem:[%s274 + $0x238] sm:$0xff]
        %v394 = vld [vmem:[%s274 + $0x240] sm:$0xff]
        %v395 = vld [vmem:[%s274 + $0x248] sm:$0xff]
        %v396 = vld [vmem:[%s274 + $0x250] sm:$0xff]
        %v397 = vld [vmem:[%s274 + $0x258] sm:$0xff]
        %v398 = vld [vmem:[%s274 + $0x260] sm:$0xff]
        %v399 = vld [vmem:[%s274 + $0x268] sm:$0xff]
        %v400 = vld [vmem:[%s274 + $0x270] sm:$0xff]
        %v401 = vld [vmem:[%s274 + $0x278] sm:$0xff]
        %v402 = vld [vmem:[%s274 + $0x280] sm:$0xff]
        %v403 = vld [vmem:[%s274 + $0x288] sm:$0xff]
        %v404 = vld [vmem:[%s274 + $0x290] sm:$0xff]
        %v405 = vld [vmem:[%s274 + $0x298] sm:$0xff]
        %v406 = vld [vmem:[%s274 + $0x2a0] sm:$0xff]
        %v407 = vld [vmem:[%s274 + $0x2a8] sm:$0xff]
        %v408 = vld [vmem:[%s274 + $0x2b0] sm:$0xff]
        %v409 = vld [vmem:[%s274 + $0x2b8] sm:$0xff]
        %v410 = vld [vmem:[%s274 + $0x2c0] sm:$0xff]
        %v411 = vld [vmem:[%s274 + $0x2c8] sm:$0xff]
        %v412 = vld [vmem:[%s274 + $0x2d0] sm:$0xff]
        %v413 = vld [vmem:[%s274 + $0x2d8] sm:$0xff]
        %v414 = vld [vmem:[%s274 + $0x2e0] sm:$0xff]
        %v415 = vld [vmem:[%s274 + $0x2e8] sm:$0xff]
        %v416 = vld [vmem:[%s274 + $0x2f0] sm:$0xff]
        %v417 = vld [vmem:[%s274 + $0x2f8] sm:$0xff]
        %v418 = vld [vmem:[%s274 + $0x300] sm:$0xff]
        %v419 = vld [vmem:[%s274 + $0x308] sm:$0xff]
        %v420 = vld [vmem:[%s274 + $0x310] sm:$0xff]
        %v421 = vld [vmem:[%s274 + $0x318] sm:$0xff]
        %v422 = vld [vmem:[%s274 + $0x320] sm:$0xff]
        %v423 = vld [vmem:[%s274 + $0x328] sm:$0xff]
        %v424 = vld [vmem:[%s274 + $0x330] sm:$0xff]
        %v425 = vld [vmem:[%s274 + $0x338] sm:$0xff]
        %v426 = vld [vmem:[%s274 + $0x340] sm:$0xff]
        %v427 = vld [vmem:[%s274 + $0x348] sm:$0xff]
        %v428 = vld [vmem:[%s274 + $0x350] sm:$0xff]
        %v429 = vld [vmem:[%s274 + $0x358] sm:$0xff]
        %v430 = vld [vmem:[%s274 + $0x360] sm:$0xff]
        %v431 = vld [vmem:[%s274 + $0x368] sm:$0xff]
        %v432 = vld [vmem:[%s274 + $0x370] sm:$0xff]
        %v433 = vld [vmem:[%s274 + $0x378] sm:$0xff]
        %v434 = vld [vmem:[%s274 + $0x380] sm:$0xff]
        %v435 = vld [vmem:[%s274 + $0x388] sm:$0xff]
        %v436 = vld [vmem:[%s274 + $0x390] sm:$0xff]
        %v437 = vld [vmem:[%s274 + $0x398] sm:$0xff]
        %v438 = vld [vmem:[%s274 + $0x3a0] sm:$0xff]
        %v439 = vld [vmem:[%s274 + $0x3a8] sm:$0xff]
        %v440 = vld [vmem:[%s274 + $0x3b0] sm:$0xff]
        %v441 = vld [vmem:[%s274 + $0x3b8] sm:$0xff]
        %v442 = vld [vmem:[%s274 + $0x3c0] sm:$0xff]
        %v443 = vld [vmem:[%s274 + $0x3c8] sm:$0xff]
        %v444 = vld [vmem:[%s274 + $0x3d0] sm:$0xff]
        %v445 = vld [vmem:[%s274 + $0x3d8] sm:$0xff]
        %v446 = vld [vmem:[%s274 + $0x3e0] sm:$0xff]
        %v447 = vld [vmem:[%s274 + $0x3e8] sm:$0xff]
        %v448 = vld [vmem:[%s274 + $0x3f0] sm:$0xff]
        %v449 = vld [vmem:[%s274 + $0x3f8] sm:$0xff]
        %v452 = vunpack.c.l.b16 %v320
        %v453 = vunpack.c.h.b16 %v320
        %v454 = vunpack.c.l.b16 %v321
        %v455 = vunpack.c.h.b16 %v321
        %v456 = vpack.c.b16 %v452, %v452
        %v457 = vpack.c.b16 %v453, %v453
        %v458 = vpack.c.b16 %v454, %v454
        %v459 = vpack.c.b16 %v455, %v455
        %v592 = vunpack.c.l.b16 %v322
        %v593 = vunpack.c.h.b16 %v322
        %v594 = vunpack.c.l.b16 %v323
        %v595 = vunpack.c.h.b16 %v323
        %v596 = vunpack.c.l.b16 %v324
        %v597 = vunpack.c.h.b16 %v324
        %v598 = vunpack.c.l.b16 %v325
        %v599 = vunpack.c.h.b16 %v325
        %v600 = vunpack.c.l.b16 %v326
        %v601 = vunpack.c.h.b16 %v326
        %v602 = vunpack.c.l.b16 %v327
        %v603 = vunpack.c.h.b16 %v327
        %v604 = vunpack.c.l.b16 %v328
        %v605 = vunpack.c.h.b16 %v328
        %v606 = vunpack.c.l.b16 %v329
        %v607 = vunpack.c.h.b16 %v329
        %v608 = vunpack.c.l.b16 %v330
        %v609 = vunpack.c.h.b16 %v330
        %v610 = vunpack.c.l.b16 %v331
        %v611 = vunpack.c.h.b16 %v331
        %v612 = vunpack.c.l.b16 %v332
        %v613 = vunpack.c.h.b16 %v332
        %v614 = vunpack.c.l.b16 %v333
        %v615 = vunpack.c.h.b16 %v333
        %v616 = vunpack.c.l.b16 %v334
        %v617 = vunpack.c.h.b16 %v334
        %v618 = vunpack.c.l.b16 %v335
        %v619 = vunpack.c.h.b16 %v335
        %v620 = vunpack.c.l.b16 %v336
        %v621 = vunpack.c.h.b16 %v336
        %v622 = vunpack.c.l.b16 %v337
        %v623 = vunpack.c.h.b16 %v337
        %v624 = vunpack.c.l.b16 %v338
        %v625 = vunpack.c.h.b16 %v338
        %v626 = vunpack.c.l.b16 %v339
        %v627 = vunpack.c.h.b16 %v339
        %v628 = vunpack.c.l.b16 %v340
        %v629 = vunpack.c.h.b16 %v340
        %v630 = vunpack.c.l.b16 %v341
        %v631 = vunpack.c.h.b16 %v341
        %v632 = vunpack.c.l.b16 %v342
        %v633 = vunpack.c.h.b16 %v342
        %v634 = vunpack.c.l.b16 %v343
        %v635 = vunpack.c.h.b16 %v343
        %v636 = vunpack.c.l.b16 %v344
        %v637 = vunpack.c.h.b16 %v344
        %v638 = vunpack.c.l.b16 %v345
        %v639 = vunpack.c.h.b16 %v345
        %v640 = vunpack.c.l.b16 %v346
        %v641 = vunpack.c.h.b16 %v346
        %v642 = vunpack.c.l.b16 %v347
        %v643 = vunpack.c.h.b16 %v347
        %v644 = vunpack.c.l.b16 %v348
        %v645 = vunpack.c.h.b16 %v348
        %v646 = vunpack.c.l.b16 %v349
        %v647 = vunpack.c.h.b16 %v349
        %v648 = vunpack.c.l.b16 %v350
        %v649 = vunpack.c.h.b16 %v350
        %v650 = vunpack.c.l.b16 %v351
        %v651 = vunpack.c.h.b16 %v351
        %v652 = vunpack.c.l.b16 %v352
        %v653 = vunpack.c.h.b16 %v352
        %v654 = vunpack.c.l.b16 %v353
        %v655 = vunpack.c.h.b16 %v353
        %v656 = vunpack.c.l.b16 %v354
        %v657 = vunpack.c.h.b16 %v354
        %v658 = vunpack.c.l.b16 %v355
        %v659 = vunpack.c.h.b16 %v355
        %v660 = vunpack.c.l.b16 %v356
        %v661 = vunpack.c.h.b16 %v356
        %v662 = vunpack.c.l.b16 %v357
        %v663 = vunpack.c.h.b16 %v357
        %v664 = vunpack.c.l.b16 %v358
        %v665 = vunpack.c.h.b16 %v358
        %v666 = vunpack.c.l.b16 %v359
        %v667 = vunpack.c.h.b16 %v359
        %v668 = vunpack.c.l.b16 %v360
        %v669 = vunpack.c.h.b16 %v360
        %v670 = vunpack.c.l.b16 %v361
        %v671 = vunpack.c.h.b16 %v361
        %v672 = vunpack.c.l.b16 %v362
        %v673 = vunpack.c.h.b16 %v362
        %v674 = vunpack.c.l.b16 %v363
        %v675 = vunpack.c.h.b16 %v363
        %v676 = vunpack.c.l.b16 %v364
        %v677 = vunpack.c.h.b16 %v364
        %v678 = vunpack.c.l.b16 %v365
        %v679 = vunpack.c.h.b16 %v365
        %v680 = vunpack.c.l.b16 %v366
        %v681 = vunpack.c.h.b16 %v366
        %v682 = vunpack.c.l.b16 %v367
        %v683 = vunpack.c.h.b16 %v367
        %v684 = vunpack.c.l.b16 %v368
        %v685 = vunpack.c.h.b16 %v368
        %v686 = vunpack.c.l.b16 %v369
        %v687 = vunpack.c.h.b16 %v369
        %v688 = vunpack.c.l.b16 %v370
        %v689 = vunpack.c.h.b16 %v370
        %v690 = vunpack.c.l.b16 %v371
        %v691 = vunpack.c.h.b16 %v371
        %v692 = vunpack.c.l.b16 %v372
        %v693 = vunpack.c.h.b16 %v372
        %v694 = vunpack.c.l.b16 %v373
        %v695 = vunpack.c.h.b16 %v373
        %v696 = vunpack.c.l.b16 %v374
        %v697 = vunpack.c.h.b16 %v374
        %v698 = vunpack.c.l.b16 %v375
        %v699 = vunpack.c.h.b16 %v375
        %v700 = vunpack.c.l.b16 %v376
        %v701 = vunpack.c.h.b16 %v376
        %v702 = vunpack.c.l.b16 %v377
        %v703 = vunpack.c.h.b16 %v377
        %v704 = vunpack.c.l.b16 %v378
        %v705 = vunpack.c.h.b16 %v378
        %v706 = vunpack.c.l.b16 %v379
        %v707 = vunpack.c.h.b16 %v379
        %v708 = vunpack.c.l.b16 %v380
        %v709 = vunpack.c.h.b16 %v380
        %v710 = vunpack.c.l.b16 %v381
        %v711 = vunpack.c.h.b16 %v381
        %v712 = vunpack.c.l.b16 %v382
        %v713 = vunpack.c.h.b16 %v382
        %v714 = vunpack.c.l.b16 %v383
        %v715 = vunpack.c.h.b16 %v383
        %v716 = vunpack.c.l.b16 %v384
        %v717 = vunpack.c.h.b16 %v384
        %v718 = vunpack.c.l.b16 %v385
        %v719 = vunpack.c.h.b16 %v385
        %v720 = vunpack.c.l.b16 %v386
        %v721 = vunpack.c.h.b16 %v386
        %v722 = vunpack.c.l.b16 %v387
        %v723 = vunpack.c.h.b16 %v387
        %v724 = vunpack.c.l.b16 %v388
        %v725 = vunpack.c.h.b16 %v388
        %v726 = vunpack.c.l.b16 %v389
        %v727 = vunpack.c.h.b16 %v389
        %v728 = vunpack.c.l.b16 %v390
        %v729 = vunpack.c.h.b16 %v390
        %v730 = vunpack.c.l.b16 %v391
        %v731 = vunpack.c.h.b16 %v391
        %v732 = vunpack.c.l.b16 %v392
        %v733 = vunpack.c.h.b16 %v392
        %v734 = vunpack.c.l.b16 %v393
        %v735 = vunpack.c.h.b16 %v393
        %v736 = vunpack.c.l.b16 %v394
        %v737 = vunpack.c.h.b16 %v394
        %v738 = vunpack.c.l.b16 %v395
        %v739 = vunpack.c.h.b16 %v395
        %v740 = vunpack.c.l.b16 %v396
        %v741 = vunpack.c.h.b16 %v396
        %v742 = vunpack.c.l.b16 %v397
        %v743 = vunpack.c.h.b16 %v397
        %v744 = vunpack.c.l.b16 %v398
        %v745 = vunpack.c.h.b16 %v398
        %v746 = vunpack.c.l.b16 %v399
        %v747 = vunpack.c.h.b16 %v399
        %v748 = vunpack.c.l.b16 %v400
        %v749 = vunpack.c.h.b16 %v400
        %v750 = vunpack.c.l.b16 %v401
        %v751 = vunpack.c.h.b16 %v401
        %v752 = vunpack.c.l.b16 %v402
        %v753 = vunpack.c.h.b16 %v402
        %v754 = vunpack.c.l.b16 %v403
        %v755 = vunpack.c.h.b16 %v403
        %v756 = vunpack.c.l.b16 %v404
        %v757 = vunpack.c.h.b16 %v404
        %v758 = vunpack.c.l.b16 %v405
        %v759 = vunpack.c.h.b16 %v405
        %v760 = vunpack.c.l.b16 %v406
        %v761 = vunpack.c.h.b16 %v406
        %v762 = vunpack.c.l.b16 %v407
        %v763 = vunpack.c.h.b16 %v407
        %v764 = vunpack.c.l.b16 %v408
        %v765 = vunpack.c.h.b16 %v408
        %v766 = vunpack.c.l.b16 %v409
        %v767 = vunpack.c.h.b16 %v409
        %v768 = vunpack.c.l.b16 %v410
        %v769 = vunpack.c.h.b16 %v410
        %v770 = vunpack.c.l.b16 %v411
        %v771 = vunpack.c.h.b16 %v411
        %v772 = vunpack.c.l.b16 %v412
        %v773 = vunpack.c.h.b16 %v412
        %v774 = vunpack.c.l.b16 %v413
        %v775 = vunpack.c.h.b16 %v413
        %v776 = vunpack.c.l.b16 %v414
        %v777 = vunpack.c.h.b16 %v414
        %v778 = vunpack.c.l.b16 %v415
        %v779 = vunpack.c.h.b16 %v415
        %v780 = vunpack.c.l.b16 %v416
        %v781 = vunpack.c.h.b16 %v416
        %v782 = vunpack.c.l.b16 %v417
        %v783 = vunpack.c.h.b16 %v417
        %v784 = vunpack.c.l.b16 %v418
        %v785 = vunpack.c.h.b16 %v418
        %v786 = vunpack.c.l.b16 %v419
        %v787 = vunpack.c.h.b16 %v419
        %v788 = vunpack.c.l.b16 %v420
        %v789 = vunpack.c.h.b16 %v420
        %v790 = vunpack.c.l.b16 %v421
        %v791 = vunpack.c.h.b16 %v421
        %v792 = vunpack.c.l.b16 %v422
        %v793 = vunpack.c.h.b16 %v422
        %v794 = vunpack.c.l.b16 %v423
        %v795 = vunpack.c.h.b16 %v423
        %v796 = vunpack.c.l.b16 %v424
        %v797 = vunpack.c.h.b16 %v424
        %v798 = vunpack.c.l.b16 %v425
        %v799 = vunpack.c.h.b16 %v425
        %v800 = vunpack.c.l.b16 %v426
        %v801 = vunpack.c.h.b16 %v426
        %v802 = vunpack.c.l.b16 %v427
        %v803 = vunpack.c.h.b16 %v427
        %v804 = vunpack.c.l.b16 %v428
        %v805 = vunpack.c.h.b16 %v428
        %v806 = vunpack.c.l.b16 %v429
        %v807 = vunpack.c.h.b16 %v429
        %v808 = vunpack.c.l.b16 %v430
        %v809 = vunpack.c.h.b16 %v430
        %v810 = vunpack.c.l.b16 %v431
        %v811 = vunpack.c.h.b16 %v431
        %v812 = vunpack.c.l.b16 %v432
        %v813 = vunpack.c.h.b16 %v432
        %v814 = vunpack.c.l.b16 %v433
        %v815 = vunpack.c.h.b16 %v433
        %v816 = vunpack.c.l.b16 %v434
        %v817 = vunpack.c.h.b16 %v434
        %v818 = vunpack.c.l.b16 %v435
        %v819 = vunpack.c.h.b16 %v435
        %v820 = vunpack.c.l.b16 %v436
        %v821 = vunpack.c.h.b16 %v436
        %v822 = vunpack.c.l.b16 %v437
        %v823 = vunpack.c.h.b16 %v437
        %v824 = vunpack.c.l.b16 %v438
        %v825 = vunpack.c.h.b16 %v438
        %v826 = vunpack.c.l.b16 %v439
        %v827 = vunpack.c.h.b16 %v439
        %v828 = vunpack.c.l.b16 %v440
        %v829 = vunpack.c.h.b16 %v440
        %v830 = vunpack.c.l.b16 %v441
        %v831 = vunpack.c.h.b16 %v441
        %v832 = vunpack.c.l.b16 %v442
        %v833 = vunpack.c.h.b16 %v442
        %v834 = vunpack.c.l.b16 %v443
        %v835 = vunpack.c.h.b16 %v443
        %v836 = vunpack.c.l.b16 %v444
        %v837 = vunpack.c.h.b16 %v444
        %v838 = vunpack.c.l.b16 %v445
        %v839 = vunpack.c.h.b16 %v445
        %v840 = vunpack.c.l.b16 %v446
        %v841 = vunpack.c.h.b16 %v446
        %v842 = vunpack.c.l.b16 %v447
        %v843 = vunpack.c.h.b16 %v447
        %v844 = vunpack.c.l.b16 %v448
        %v845 = vunpack.c.h.b16 %v448
        %v846 = vunpack.c.l.b16 %v449
        %v847 = vunpack.c.h.b16 %v449
        %v848 = vpack.c.b16 %v596, %v592
        %v849 = vpack.c.b16 %v597, %v593
        %v850 = vpack.c.b16 %v598, %v594
        %v851 = vpack.c.b16 %v599, %v595
        %v852 = vpack.c.b16 %v604, %v600
        %v853 = vpack.c.b16 %v605, %v601
        %v854 = vpack.c.b16 %v606, %v602
        %v855 = vpack.c.b16 %v607, %v603
        %v856 = vpack.c.b16 %v612, %v608
        %v857 = vpack.c.b16 %v613, %v609
        %v858 = vpack.c.b16 %v614, %v610
        %v859 = vpack.c.b16 %v615, %v611
        %v860 = vpack.c.b16 %v620, %v616
        %v861 = vpack.c.b16 %v621, %v617
        %v862 = vpack.c.b16 %v622, %v618
        %v863 = vpack.c.b16 %v623, %v619
        %v864 = vpack.c.b16 %v628, %v624
        %v865 = vpack.c.b16 %v629, %v625
        %v866 = vpack.c.b16 %v630, %v626
        %v867 = vpack.c.b16 %v631, %v627
        %v868 = vpack.c.b16 %v636, %v632
        %v869 = vpack.c.b16 %v637, %v633
        %v870 = vpack.c.b16 %v638, %v634
        %v871 = vpack.c.b16 %v639, %v635
        %v872 = vpack.c.b16 %v644, %v640
        %v873 = vpack.c.b16 %v645, %v641
        %v874 = vpack.c.b16 %v646, %v642
        %v875 = vpack.c.b16 %v647, %v643
        %v876 = vpack.c.b16 %v652, %v648
        %v877 = vpack.c.b16 %v653, %v649
        %v878 = vpack.c.b16 %v654, %v650
        %v879 = vpack.c.b16 %v655, %v651
        %v880 = vpack.c.b16 %v660, %v656
        %v881 = vpack.c.b16 %v661, %v657
        %v882 = vpack.c.b16 %v662, %v658
        %v883 = vpack.c.b16 %v663, %v659
        %v884 = vpack.c.b16 %v668, %v664
        %v885 = vpack.c.b16 %v669, %v665
        %v886 = vpack.c.b16 %v670, %v666
        %v887 = vpack.c.b16 %v671, %v667
        %v888 = vpack.c.b16 %v676, %v672
        %v889 = vpack.c.b16 %v677, %v673
        %v890 = vpack.c.b16 %v678, %v674
        %v891 = vpack.c.b16 %v679, %v675
        %v892 = vpack.c.b16 %v684, %v680
        %v893 = vpack.c.b16 %v685, %v681
        %v894 = vpack.c.b16 %v686, %v682
        %v895 = vpack.c.b16 %v687, %v683
        %v896 = vpack.c.b16 %v692, %v688
        %v897 = vpack.c.b16 %v693, %v689
        %v898 = vpack.c.b16 %v694, %v690
        %v899 = vpack.c.b16 %v695, %v691
        %v900 = vpack.c.b16 %v700, %v696
        %v901 = vpack.c.b16 %v701, %v697
        %v902 = vpack.c.b16 %v702, %v698
        %v903 = vpack.c.b16 %v703, %v699
        %v904 = vpack.c.b16 %v708, %v704
        %v905 = vpack.c.b16 %v709, %v705
        %v906 = vpack.c.b16 %v710, %v706
        %v907 = vpack.c.b16 %v711, %v707
        %v908 = vpack.c.b16 %v716, %v712
        %v909 = vpack.c.b16 %v717, %v713
        %v910 = vpack.c.b16 %v718, %v714
        %v911 = vpack.c.b16 %v719, %v715
        %v912 = vpack.c.b16 %v724, %v720
        %v913 = vpack.c.b16 %v725, %v721
        %v914 = vpack.c.b16 %v726, %v722
        %v915 = vpack.c.b16 %v727, %v723
        %v916 = vpack.c.b16 %v732, %v728
        %v917 = vpack.c.b16 %v733, %v729
        %v918 = vpack.c.b16 %v734, %v730
        %v919 = vpack.c.b16 %v735, %v731
        %v920 = vpack.c.b16 %v740, %v736
        %v921 = vpack.c.b16 %v741, %v737
        %v922 = vpack.c.b16 %v742, %v738
        %v923 = vpack.c.b16 %v743, %v739
        %v924 = vpack.c.b16 %v748, %v744
        %v925 = vpack.c.b16 %v749, %v745
        %v926 = vpack.c.b16 %v750, %v746
        %v927 = vpack.c.b16 %v751, %v747
        %v928 = vpack.c.b16 %v756, %v752
        %v929 = vpack.c.b16 %v757, %v753
        %v930 = vpack.c.b16 %v758, %v754
        %v931 = vpack.c.b16 %v759, %v755
        %v932 = vpack.c.b16 %v764, %v760
        %v933 = vpack.c.b16 %v765, %v761
        %v934 = vpack.c.b16 %v766, %v762
        %v935 = vpack.c.b16 %v767, %v763
        %v936 = vpack.c.b16 %v772, %v768
        %v937 = vpack.c.b16 %v773, %v769
        %v938 = vpack.c.b16 %v774, %v770
        %v939 = vpack.c.b16 %v775, %v771
        %v940 = vpack.c.b16 %v780, %v776
        %v941 = vpack.c.b16 %v781, %v777
        %v942 = vpack.c.b16 %v782, %v778
        %v943 = vpack.c.b16 %v783, %v779
        %v944 = vpack.c.b16 %v788, %v784
        %v945 = vpack.c.b16 %v789, %v785
        %v946 = vpack.c.b16 %v790, %v786
        %v947 = vpack.c.b16 %v791, %v787
        %v948 = vpack.c.b16 %v796, %v792
        %v949 = vpack.c.b16 %v797, %v793
        %v950 = vpack.c.b16 %v798, %v794
        %v951 = vpack.c.b16 %v799, %v795
        %v952 = vpack.c.b16 %v804, %v800
        %v953 = vpack.c.b16 %v805, %v801
        %v954 = vpack.c.b16 %v806, %v802
        %v955 = vpack.c.b16 %v807, %v803
        %v956 = vpack.c.b16 %v812, %v808
        %v957 = vpack.c.b16 %v813, %v809
        %v958 = vpack.c.b16 %v814, %v810
        %v959 = vpack.c.b16 %v815, %v811
        %v960 = vpack.c.b16 %v820, %v816
        %v961 = vpack.c.b16 %v821, %v817
        %v962 = vpack.c.b16 %v822, %v818
        %v963 = vpack.c.b16 %v823, %v819
        %v964 = vpack.c.b16 %v828, %v824
        %v965 = vpack.c.b16 %v829, %v825
        %v966 = vpack.c.b16 %v830, %v826
        %v967 = vpack.c.b16 %v831, %v827
        %v968 = vpack.c.b16 %v836, %v832
        %v969 = vpack.c.b16 %v837, %v833
        %v970 = vpack.c.b16 %v838, %v834
        %v971 = vpack.c.b16 %v839, %v835
        %v972 = vpack.c.b16 %v844, %v840
        %v973 = vpack.c.b16 %v845, %v841
        %v974 = vpack.c.b16 %v846, %v842
        %v975 = vpack.c.b16 %v847, %v843
        %1104 = vmatprep.subr.bf16.mxu0 %v849
        %1105 = vmatpush1.bf16.msra.mxu0 %v848
        %1106 = vmatprep.subr.bf16.mxu0 %v853
        %1107 = vmatpush1.bf16.msra.mxu0 %v852
        %1108 = vmatprep.subr.bf16.mxu0 %v857
        %1109 = vmatpush1.bf16.msra.mxu0 %v856
        %1110 = vmatprep.subr.bf16.mxu0 %v861
        %1111 = vmatpush1.bf16.msra.mxu0 %v860
        %1112 = vmatprep.subr.bf16.mxu0 %v865
        %1113 = vmatpush1.bf16.msra.mxu0 %v864
        %1114 = vmatprep.subr.bf16.mxu0 %v869
        %1115 = vmatpush1.bf16.msra.mxu0 %v868
        %1116 = vmatprep.subr.bf16.mxu0 %v873
        %1117 = vmatpush1.bf16.msra.mxu0 %v872
        %1118 = vmatprep.subr.bf16.mxu0 %v877
        %1119 = vmatpush1.bf16.msra.mxu0 %v876
        %1120 = vmatprep.subr.bf16.mxu0 %v881
        %1121 = vmatpush1.bf16.msra.mxu0 %v880
        %1122 = vmatprep.subr.bf16.mxu0 %v885
        %1123 = vmatpush1.bf16.msra.mxu0 %v884
        %1124 = vmatprep.subr.bf16.mxu0 %v889
        %1125 = vmatpush1.bf16.msra.mxu0 %v888
        %1126 = vmatprep.subr.bf16.mxu0 %v893
        %1127 = vmatpush1.bf16.msra.mxu0 %v892
        %1128 = vmatprep.subr.bf16.mxu0 %v897
        %1129 = vmatpush1.bf16.msra.mxu0 %v896
        %1130 = vmatprep.subr.bf16.mxu0 %v901
        %1131 = vmatpush1.bf16.msra.mxu0 %v900
        %1132 = vmatprep.subr.bf16.mxu0 %v905
        %1133 = vmatpush1.bf16.msra.mxu0 %v904
        %1134 = vmatprep.subr.bf16.mxu0 %v909
        %1135 = vmatpush1.bf16.msra.mxu0 %v908
        %1136 = vmatprep.mubr.bf16.mxu0 %v457
        %1137 = vmatmul.mubr.bf16.gmra.mrb[0].mxu0 %v456
        %v1138 = vpop.f32.mrb[0].mxu0
        %v1139 = vadd.f32 0.0, %v1138
        %v1140 = vpop.f32.mrb[0].mxu0
        %v1141 = vadd.f32 0.0, %v1140
        %v1142 = vpop.f32.mrb[0].mxu0
        %v1143 = vpop.f32.mrb[0].mxu0
        %1144 = vdwg.mxu0
        %1145 = vmatprep.subr.bf16.mxu0 %v913
        %1146 = vmatpush1.bf16.msra.mxu0 %v912
        %1147 = vmatprep.subr.bf16.mxu0 %v917
        %1148 = vmatpush1.bf16.msra.mxu0 %v916
        %1149 = vmatprep.subr.bf16.mxu0 %v921
        %1150 = vmatpush1.bf16.msra.mxu0 %v920
        %1151 = vmatprep.subr.bf16.mxu0 %v925
        %1152 = vmatpush1.bf16.msra.mxu0 %v924
        %1153 = vmatprep.subr.bf16.mxu0 %v929
        %1154 = vmatpush1.bf16.msra.mxu0 %v928
        %1155 = vmatprep.subr.bf16.mxu0 %v933
        %1156 = vmatpush1.bf16.msra.mxu0 %v932
        %1157 = vmatprep.subr.bf16.mxu0 %v937
        %1158 = vmatpush1.bf16.msra.mxu0 %v936
        %1159 = vmatprep.subr.bf16.mxu0 %v941
        %1160 = vmatpush1.bf16.msra.mxu0 %v940
        %1161 = vmatprep.subr.bf16.mxu0 %v945
        %1162 = vmatpush1.bf16.msra.mxu0 %v944
        %1163 = vmatprep.subr.bf16.mxu0 %v949
        %1164 = vmatpush1.bf16.msra.mxu0 %v948
        %1165 = vmatprep.subr.bf16.mxu0 %v953
        %1166 = vmatpush1.bf16.msra.mxu0 %v952
        %1167 = vmatprep.subr.bf16.mxu0 %v957
        %1168 = vmatpush1.bf16.msra.mxu0 %v956
        %1169 = vmatprep.subr.bf16.mxu0 %v961
        %1170 = vmatpush1.bf16.msra.mxu0 %v960
        %1171 = vmatprep.subr.bf16.mxu0 %v965
        %1172 = vmatpush1.bf16.msra.mxu0 %v964
        %1173 = vmatprep.subr.bf16.mxu0 %v969
        %1174 = vmatpush1.bf16.msra.mxu0 %v968
        %1175 = vmatprep.subr.bf16.mxu0 %v973
        %1176 = vmatpush1.bf16.msra.mxu0 %v972
        %1177 = vmatprep.mubr.bf16.mxu0 %v459
        %1178 = vmatmul.mubr.bf16.gmra.mrb[0].mxu0 %v458
        %v1179 = vpop.f32.mrb[0].mxu0
        %v1180 = vadd.f32 %v1139, %v1179
        %v1181 = vpop.f32.mrb[0].mxu0
        %v1182 = vadd.f32 %v1141, %v1181
        %v1183 = vpop.f32.mrb[0].mxu0
        %v1184 = vpop.f32.mrb[0].mxu0
        %1185 = vdwg.mxu0
        %1186 = vmatprep.subr.bf16.mxu0 %v851
        %1187 = vmatpush1.bf16.msra.mxu0 %v850
        %1188 = vmatprep.subr.bf16.mxu0 %v855
        %1189 = vmatpush1.bf16.msra.mxu0 %v854
        %1190 = vmatprep.subr.bf16.mxu0 %v859
        %1191 = vmatpush1.bf16.msra.mxu0 %v858
        %1192 = vmatprep.subr.bf16.mxu0 %v863
        %1193 = vmatpush1.bf16.msra.mxu0 %v862
        %1194 = vmatprep.subr.bf16.mxu0 %v867
        %1195 = vmatpush1.bf16.msra.mxu0 %v866
        %1196 = vmatprep.subr.bf16.mxu0 %v871
        %1197 = vmatpush1.bf16.msra.mxu0 %v870
        %1198 = vmatprep.subr.bf16.mxu0 %v875
        %1199 = vmatpush1.bf16.msra.mxu0 %v874
        %1200 = vmatprep.subr.bf16.mxu0 %v879
        %1201 = vmatpush1.bf16.msra.mxu0 %v878
        %1202 = vmatprep.subr.bf16.mxu0 %v883
        %1203 = vmatpush1.bf16.msra.mxu0 %v882
        %1204 = vmatprep.subr.bf16.mxu0 %v887
        %1205 = vmatpush1.bf16.msra.mxu0 %v886
        %1206 = vmatprep.subr.bf16.mxu0 %v891
        %1207 = vmatpush1.bf16.msra.mxu0 %v890
        %1208 = vmatprep.subr.bf16.mxu0 %v895
        %1209 = vmatpush1.bf16.msra.mxu0 %v894
        %1210 = vmatprep.subr.bf16.mxu0 %v899
        %1211 = vmatpush1.bf16.msra.mxu0 %v898
        %1212 = vmatprep.subr.bf16.mxu0 %v903
        %1213 = vmatpush1.bf16.msra.mxu0 %v902
        %1214 = vmatprep.subr.bf16.mxu0 %v907
        %1215 = vmatpush1.bf16.msra.mxu0 %v906
        %1216 = vmatprep.subr.bf16.mxu0 %v911
        %1217 = vmatpush1.bf16.msra.mxu0 %v910
        %1218 = vmatprep.mubr.bf16.mxu0 %v457
        %1219 = vmatmul.mubr.bf16.gmra.mrb[0].mxu0 %v456
        %v1220 = vpop.f32.mrb[0].mxu0
        %v1221 = vadd.f32 0.0, %v1220
        %v1222 = vpop.f32.mrb[0].mxu0
        %v1223 = vadd.f32 0.0, %v1222
        %v1224 = vpop.f32.mrb[0].mxu0
        %v1225 = vpop.f32.mrb[0].mxu0
        %1226 = vdwg.mxu0
        %1227 = vmatprep.subr.bf16.mxu0 %v915
        %1228 = vmatpush1.bf16.msra.mxu0 %v914
        %1229 = vmatprep.subr.bf16.mxu0 %v919
        %1230 = vmatpush1.bf16.msra.mxu0 %v918
        %1231 = vmatprep.subr.bf16.mxu0 %v923
        %1232 = vmatpush1.bf16.msra.mxu0 %v922
        %1233 = vmatprep.subr.bf16.mxu0 %v927
        %1234 = vmatpush1.bf16.msra.mxu0 %v926
        %1235 = vmatprep.subr.bf16.mxu0 %v931
        %1236 = vmatpush1.bf16.msra.mxu0 %v930
        %1237 = vmatprep.subr.bf16.mxu0 %v935
        %1238 = vmatpush1.bf16.msra.mxu0 %v934
        %1239 = vmatprep.subr.bf16.mxu0 %v939
        %1240 = vmatpush1.bf16.msra.mxu0 %v938
        %1241 = vmatprep.subr.bf16.mxu0 %v943
        %1242 = vmatpush1.bf16.msra.mxu0 %v942
        %1243 = vmatprep.subr.bf16.mxu0 %v947
        %1244 = vmatpush1.bf16.msra.mxu0 %v946
        %1245 = vmatprep.subr.bf16.mxu0 %v951
        %1246 = vmatpush1.bf16.msra.mxu0 %v950
        %1247 = vmatprep.subr.bf16.mxu0 %v955
        %1248 = vmatpush1.bf16.msra.mxu0 %v954
        %1249 = vmatprep.subr.bf16.mxu0 %v959
        %1250 = vmatpush1.bf16.msra.mxu0 %v958
        %1251 = vmatprep.subr.bf16.mxu0 %v963
        %1252 = vmatpush1.bf16.msra.mxu0 %v962
        %1253 = vmatprep.subr.bf16.mxu0 %v967
        %1254 = vmatpush1.bf16.msra.mxu0 %v966
        %1255 = vmatprep.subr.bf16.mxu0 %v971
        %1256 = vmatpush1.bf16.msra.mxu0 %v970
        %1257 = vmatprep.subr.bf16.mxu0 %v975
        %1258 = vmatpush1.bf16.msra.mxu0 %v974
        %1259 = vmatprep.mubr.bf16.mxu0 %v459
        %1260 = vmatmul.mubr.bf16.gmra.mrb[0].mxu0 %v458
        %v1261 = vpop.f32.mrb[0].mxu0
        %v1262 = vadd.f32 %v1221, %v1261
        %v1263 = vpop.f32.mrb[0].mxu0
        %v1264 = vadd.f32 %v1223, %v1263
        %v1265 = vpop.f32.mrb[0].mxu0
        %v1266 = vpop.f32.mrb[0].mxu0
        %1267 = vdwg.mxu0
        %v1268 = vadd.f32 %v316, %v1180
        %v1269 = vadd.f32 %v317, %v1182
        %v1270 = vadd.f32 %v318, %v1262
        %v1271 = vadd.f32 %v319, %v1264
        %1272 = vst [vmem:[#allocation2] sm:$0xff] %v1268
        %1273 = vst [vmem:[#allocation2 + $0x8] sm:$0xff] %v1269
        %1274 = vst [vmem:[#allocation2 + $0x10] sm:$0xff] %v1270
        %1275 = vst [vmem:[#allocation2 + $0x18] sm:$0xff] %v1271
        %p1276 = scmp.eq.s32.totalorder %s28, 1
        // Predicated region
        $region57: #{tpu_custom_call.1} parent=39 // pred_check
          %p1277 = pneg %p1276
        $region58: #{tpu_custom_call.1} parent=39 // pred_check_branch
          %1279 = sbr.rel (%p1277) target = $region60
        $region59: #{tpu_custom_call.1} parent=39 // pred_region
          %v1280 = vld [vmem:[#allocation2] sm:$0xff]
          %v1281 = vld [vmem:[#allocation2 + $0x8] sm:$0xff]
          %v1282 = vld [vmem:[#allocation2 + $0x10] sm:$0xff]
          %v1283 = vld [vmem:[#allocation2 + $0x18] sm:$0xff]
          %v1284 = vld [vmem:[%s2] sm:$0xf]
          %v1286 = vlaneseq
          %v1287 = vshrl.u32 %v1286, 7
          %v1288 = vsub.s32 0, %v1287
          %v1289 = vrot.slane %v1284, %v1288
          %v1290 = vlaneseq
          %v1291 = vshrl.u32 %v1290, 7
          %v1292 = vsub.s32 1, %v1291
          %v1293 = vrot.slane %v1284, %v1292
          %v1294 = vlaneseq
          %v1295 = vshrl.u32 %v1294, 7
          %v1296 = vsub.s32 2, %v1295
          %v1297 = vrot.slane %v1284, %v1296
          %v1298 = vlaneseq
          %v1299 = vshrl.u32 %v1298, 7
          %v1300 = vsub.s32 3, %v1299
          %v1301 = vrot.slane %v1284, %v1300
          %v1306 = vadd.f32 %v1280, %v1289
          %v1307 = vadd.f32 %v1281, %v1293
          %v1308 = vadd.f32 %v1282, %v1297
          %v1309 = vadd.f32 %v1283, %v1301
          %v1310 = vmax.f32 %v1306, 0.0
          %v1311 = vmax.f32 %v1307, 0.0
          %v1312 = vmax.f32 %v1308, 0.0
          %v1313 = vmax.f32 %v1309, 0.0
          %v1314 = vpack.c.bf16 %v1310, %v1310
          %v1315 = vpack.c.bf16 %v1311, %v1311
          %v1316 = vpack.c.bf16 %v1312, %v1312
          %v1317 = vpack.c.bf16 %v1313, %v1313
          %v1318 = vld [vmem:[#allocation8] sm:$0xf]
          %v1319 = vld [vmem:[#allocation8 + $0x4] sm:$0xf]
          %v1320 = vld [vmem:[#allocation8 + $0x8] sm:$0xf]
          %v1321 = vld [vmem:[#allocation8 + $0xc] sm:$0xf]
          %v1322 = vld [vmem:[#allocation8 + $0x10] sm:$0xf]
          %v1323 = vld [vmem:[#allocation8 + $0x14] sm:$0xf]
          %v1324 = vld [vmem:[#allocation8 + $0x18] sm:$0xf]
          %v1325 = vld [vmem:[#allocation8 + $0x1c] sm:$0xf]
          %v1326 = vld [vmem:[#allocation8 + $0x20] sm:$0xf]
          %v1327 = vld [vmem:[#allocation8 + $0x24] sm:$0xf]
          %v1328 = vld [vmem:[#allocation8 + $0x28] sm:$0xf]
          %v1329 = vld [vmem:[#allocation8 + $0x2c] sm:$0xf]
          %v1330 = vld [vmem:[#allocation8 + $0x30] sm:$0xf]
          %v1331 = vld [vmem:[#allocation8 + $0x34] sm:$0xf]
          %v1332 = vld [vmem:[#allocation8 + $0x38] sm:$0xf]
          %v1333 = vld [vmem:[#allocation8 + $0x3c] sm:$0xf]
          %v1334 = vld [vmem:[#allocation8 + $0x40] sm:$0xf]
          %v1335 = vld [vmem:[#allocation8 + $0x44] sm:$0xf]
          %v1336 = vld [vmem:[#allocation8 + $0x48] sm:$0xf]
          %v1337 = vld [vmem:[#allocation8 + $0x4c] sm:$0xf]
          %v1338 = vld [vmem:[#allocation8 + $0x50] sm:$0xf]
          %v1339 = vld [vmem:[#allocation8 + $0x54] sm:$0xf]
          %v1340 = vld [vmem:[#allocation8 + $0x58] sm:$0xf]
          %v1341 = vld [vmem:[#allocation8 + $0x5c] sm:$0xf]
          %v1342 = vld [vmem:[#allocation8 + $0x60] sm:$0xf]
          %v1343 = vld [vmem:[#allocation8 + $0x64] sm:$0xf]
          %v1344 = vld [vmem:[#allocation8 + $0x68] sm:$0xf]
          %v1345 = vld [vmem:[#allocation8 + $0x6c] sm:$0xf]
          %v1346 = vld [vmem:[#allocation8 + $0x70] sm:$0xf]
          %v1347 = vld [vmem:[#allocation8 + $0x74] sm:$0xf]
          %v1348 = vld [vmem:[#allocation8 + $0x78] sm:$0xf]
          %v1349 = vld [vmem:[#allocation8 + $0x7c] sm:$0xf]
          %v1350 = vld [vmem:[#allocation8 + $0x80] sm:$0xf]
          %v1351 = vld [vmem:[#allocation8 + $0x84] sm:$0xf]
          %v1352 = vld [vmem:[#allocation8 + $0x88] sm:$0xf]
          %v1353 = vld [vmem:[#allocation8 + $0x8c] sm:$0xf]
          %v1354 = vld [vmem:[#allocation8 + $0x90] sm:$0xf]
          %v1355 = vld [vmem:[#allocation8 + $0x94] sm:$0xf]
          %v1356 = vld [vmem:[#allocation8 + $0x98] sm:$0xf]
          %v1357 = vld [vmem:[#allocation8 + $0x9c] sm:$0xf]
          %v1358 = vld [vmem:[#allocation8 + $0xa0] sm:$0xf]
          %v1359 = vld [vmem:[#allocation8 + $0xa4] sm:$0xf]
          %v1360 = vld [vmem:[#allocation8 + $0xa8] sm:$0xf]
          %v1361 = vld [vmem:[#allocation8 + $0xac] sm:$0xf]
          %v1362 = vld [vmem:[#allocation8 + $0xb0] sm:$0xf]
          %v1363 = vld [vmem:[#allocation8 + $0xb4] sm:$0xf]
          %v1364 = vld [vmem:[#allocation8 + $0xb8] sm:$0xf]
          %v1365 = vld [vmem:[#allocation8 + $0xbc] sm:$0xf]
          %v1366 = vld [vmem:[#allocation8 + $0xc0] sm:$0xf]
          %v1367 = vld [vmem:[#allocation8 + $0xc4] sm:$0xf]
          %v1368 = vld [vmem:[#allocation8 + $0xc8] sm:$0xf]
          %v1369 = vld [vmem:[#allocation8 + $0xcc] sm:$0xf]
          %v1370 = vld [vmem:[#allocation8 + $0xd0] sm:$0xf]
          %v1371 = vld [vmem:[#allocation8 + $0xd4] sm:$0xf]
          %v1372 = vld [vmem:[#allocation8 + $0xd8] sm:$0xf]
          %v1373 = vld [vmem:[#allocation8 + $0xdc] sm:$0xf]
          %v1374 = vld [vmem:[#allocation8 + $0xe0] sm:$0xf]
          %v1375 = vld [vmem:[#allocation8 + $0xe4] sm:$0xf]
          %v1376 = vld [vmem:[#allocation8 + $0xe8] sm:$0xf]
          %v1377 = vld [vmem:[#allocation8 + $0xec] sm:$0xf]
          %v1378 = vld [vmem:[#allocation8 + $0xf0] sm:$0xf]
          %v1379 = vld [vmem:[#allocation8 + $0xf4] sm:$0xf]
          %v1380 = vld [vmem:[#allocation8 + $0xf8] sm:$0xf]
          %v1381 = vld [vmem:[#allocation8 + $0xfc] sm:$0xf]
          %v1382 = vld [vmem:[%s4] sm:$0x1]
          %v1384 = vlaneseq
          %v1385 = vshrl.u32 %v1384, 7
          %v1386 = vsub.s32 0, %v1385
          %v1387 = vrot.slane %v1382, %v1386
          %v1453 = vunpack.c.l.b16 %v1318
          %v1454 = vunpack.c.l.b16 %v1319
          %v1455 = vunpack.c.l.b16 %v1320
          %v1456 = vunpack.c.l.b16 %v1321
          %v1457 = vunpack.c.l.b16 %v1322
          %v1458 = vunpack.c.l.b16 %v1323
          %v1459 = vunpack.c.l.b16 %v1324
          %v1460 = vunpack.c.l.b16 %v1325
          %v1461 = vunpack.c.l.b16 %v1326
          %v1462 = vunpack.c.l.b16 %v1327
          %v1463 = vunpack.c.l.b16 %v1328
          %v1464 = vunpack.c.l.b16 %v1329
          %v1465 = vunpack.c.l.b16 %v1330
          %v1466 = vunpack.c.l.b16 %v1331
          %v1467 = vunpack.c.l.b16 %v1332
          %v1468 = vunpack.c.l.b16 %v1333
          %v1469 = vunpack.c.l.b16 %v1334
          %v1470 = vunpack.c.l.b16 %v1335
          %v1471 = vunpack.c.l.b16 %v1336
          %v1472 = vunpack.c.l.b16 %v1337
          %v1473 = vunpack.c.l.b16 %v1338
          %v1474 = vunpack.c.l.b16 %v1339
          %v1475 = vunpack.c.l.b16 %v1340
          %v1476 = vunpack.c.l.b16 %v1341
          %v1477 = vunpack.c.l.b16 %v1342
          %v1478 = vunpack.c.l.b16 %v1343
          %v1479 = vunpack.c.l.b16 %v1344
          %v1480 = vunpack.c.l.b16 %v1345
          %v1481 = vunpack.c.l.b16 %v1346
          %v1482 = vunpack.c.l.b16 %v1347
          %v1483 = vunpack.c.l.b16 %v1348
          %v1484 = vunpack.c.l.b16 %v1349
          %v1485 = vunpack.c.l.b16 %v1350
          %v1486 = vunpack.c.l.b16 %v1351
          %v1487 = vunpack.c.l.b16 %v1352
          %v1488 = vunpack.c.l.b16 %v1353
          %v1489 = vunpack.c.l.b16 %v1354
          %v1490 = vunpack.c.l.b16 %v1355
          %v1491 = vunpack.c.l.b16 %v1356
          %v1492 = vunpack.c.l.b16 %v1357
          %v1493 = vunpack.c.l.b16 %v1358
          %v1494 = vunpack.c.l.b16 %v1359
          %v1495 = vunpack.c.l.b16 %v1360
          %v1496 = vunpack.c.l.b16 %v1361
          %v1497 = vunpack.c.l.b16 %v1362
          %v1498 = vunpack.c.l.b16 %v1363
          %v1499 = vunpack.c.l.b16 %v1364
          %v1500 = vunpack.c.l.b16 %v1365
          %v1501 = vunpack.c.l.b16 %v1366
          %v1502 = vunpack.c.l.b16 %v1367
          %v1503 = vunpack.c.l.b16 %v1368
          %v1504 = vunpack.c.l.b16 %v1369
          %v1505 = vunpack.c.l.b16 %v1370
          %v1506 = vunpack.c.l.b16 %v1371
          %v1507 = vunpack.c.l.b16 %v1372
          %v1508 = vunpack.c.l.b16 %v1373
          %v1509 = vunpack.c.l.b16 %v1374
          %v1510 = vunpack.c.l.b16 %v1375
          %v1511 = vunpack.c.l.b16 %v1376
          %v1512 = vunpack.c.l.b16 %v1377
          %v1513 = vunpack.c.l.b16 %v1378
          %v1514 = vunpack.c.l.b16 %v1379
          %v1515 = vunpack.c.l.b16 %v1380
          %v1516 = vunpack.c.l.b16 %v1381
          %v1517 = vpack.c.b16 %v1454, %v1453
          %v1518 = vpack.c.b16 %v1456, %v1455
          %v1519 = vpack.c.b16 %v1458, %v1457
          %v1520 = vpack.c.b16 %v1460, %v1459
          %v1521 = vpack.c.b16 %v1462, %v1461
          %v1522 = vpack.c.b16 %v1464, %v1463
          %v1523 = vpack.c.b16 %v1466, %v1465
          %v1524 = vpack.c.b16 %v1468, %v1467
          %v1525 = vpack.c.b16 %v1470, %v1469
          %v1526 = vpack.c.b16 %v1472, %v1471
          %v1527 = vpack.c.b16 %v1474, %v1473
          %v1528 = vpack.c.b16 %v1476, %v1475
          %v1529 = vpack.c.b16 %v1478, %v1477
          %v1530 = vpack.c.b16 %v1480, %v1479
          %v1531 = vpack.c.b16 %v1482, %v1481
          %v1532 = vpack.c.b16 %v1484, %v1483
          %v1533 = vpack.c.b16 %v1486, %v1485
          %v1534 = vpack.c.b16 %v1488, %v1487
          %v1535 = vpack.c.b16 %v1490, %v1489
          %v1536 = vpack.c.b16 %v1492, %v1491
          %v1537 = vpack.c.b16 %v1494, %v1493
          %v1538 = vpack.c.b16 %v1496, %v1495
          %v1539 = vpack.c.b16 %v1498, %v1497
          %v1540 = vpack.c.b16 %v1500, %v1499
          %v1541 = vpack.c.b16 %v1502, %v1501
          %v1542 = vpack.c.b16 %v1504, %v1503
          %v1543 = vpack.c.b16 %v1506, %v1505
          %v1544 = vpack.c.b16 %v1508, %v1507
          %v1545 = vpack.c.b16 %v1510, %v1509
          %v1546 = vpack.c.b16 %v1512, %v1511
          %v1547 = vpack.c.b16 %v1514, %v1513
          %v1548 = vpack.c.b16 %v1516, %v1515
          %1581 = vmatprep.subr.bf16.mxu0 0
          %1582 = vmatpush1.bf16.msra.mxu0 %v1517
          %1583 = vmatprep.subr.bf16.mxu0 0
          %1584 = vmatpush1.bf16.msra.mxu0 %v1518
          %1585 = vmatprep.subr.bf16.mxu0 0
          %1586 = vmatpush1.bf16.msra.mxu0 %v1519
          %1587 = vmatprep.subr.bf16.mxu0 0
          %1588 = vmatpush1.bf16.msra.mxu0 %v1520
          %1589 = vmatprep.subr.bf16.mxu0 0
          %1590 = vmatpush1.bf16.msra.mxu0 %v1521
          %1591 = vmatprep.subr.bf16.mxu0 0
          %1592 = vmatpush1.bf16.msra.mxu0 %v1522
          %1593 = vmatprep.subr.bf16.mxu0 0
          %1594 = vmatpush1.bf16.msra.mxu0 %v1523
          %1595 = vmatprep.subr.bf16.mxu0 0
          %1596 = vmatpush1.bf16.msra.mxu0 %v1524
          %1597 = vmatprep.subr.bf16.mxu0 0
          %1598 = vmatpush1.bf16.msra.mxu0 %v1525
          %1599 = vmatprep.subr.bf16.mxu0 0
          %1600 = vmatpush1.bf16.msra.mxu0 %v1526
          %1601 = vmatprep.subr.bf16.mxu0 0
          %1602 = vmatpush1.bf16.msra.mxu0 %v1527
          %1603 = vmatprep.subr.bf16.mxu0 0
          %1604 = vmatpush1.bf16.msra.mxu0 %v1528
          %1605 = vmatprep.subr.bf16.mxu0 0
          %1606 = vmatpush1.bf16.msra.mxu0 %v1529
          %1607 = vmatprep.subr.bf16.mxu0 0
          %1608 = vmatpush1.bf16.msra.mxu0 %v1530
          %1609 = vmatprep.subr.bf16.mxu0 0
          %1610 = vmatpush1.bf16.msra.mxu0 %v1531
          %1611 = vmatprep.subr.bf16.mxu0 0
          %1612 = vmatpush1.bf16.msra.mxu0 %v1532
          %1613 = vmatprep.mubr.bf16.mxu0 %v1315
          %1614 = vmatmul.mubr.bf16.gmra.mrb[0].mxu0 %v1314
          %v1615 = vpop.f32.mrb[0].mxu0
          %v1616 = vadd.f32 %v1387, %v1615
          %v1617 = vpop.f32.mrb[0].mxu0
          %v1618 = vpop.f32.mrb[0].mxu0
          %v1619 = vpop.f32.mrb[0].mxu0
          %1620 = vdwg.mxu0
          %1621 = vmatprep.subr.bf16.mxu0 0
          %1622 = vmatpush1.bf16.msra.mxu0 %v1533
          %1623 = vmatprep.subr.bf16.mxu0 0
          %1624 = vmatpush1.bf16.msra.mxu0 %v1534
          %1625 = vmatprep.subr.bf16.mxu0 0
          %1626 = vmatpush1.bf16.msra.mxu0 %v1535
          %1627 = vmatprep.subr.bf16.mxu0 0
          %1628 = vmatpush1.bf16.msra.mxu0 %v1536
          %1629 = vmatprep.subr.bf16.mxu0 0
          %1630 = vmatpush1.bf16.msra.mxu0 %v1537
          %1631 = vmatprep.subr.bf16.mxu0 0
          %1632 = vmatpush1.bf16.msra.mxu0 %v1538
          %1633 = vmatprep.subr.bf16.mxu0 0
          %1634 = vmatpush1.bf16.msra.mxu0 %v1539
          %1635 = vmatprep.subr.bf16.mxu0 0
          %1636 = vmatpush1.bf16.msra.mxu0 %v1540
          %1637 = vmatprep.subr.bf16.mxu0 0
          %1638 = vmatpush1.bf16.msra.mxu0 %v1541
          %1639 = vmatprep.subr.bf16.mxu0 0
          %1640 = vmatpush1.bf16.msra.mxu0 %v1542
          %1641 = vmatprep.subr.bf16.mxu0 0
          %1642 = vmatpush1.bf16.msra.mxu0 %v1543
          %1643 = vmatprep.subr.bf16.mxu0 0
          %1644 = vmatpush1.bf16.msra.mxu0 %v1544
          %1645 = vmatprep.subr.bf16.mxu0 0
          %1646 = vmatpush1.bf16.msra.mxu0 %v1545
          %1647 = vmatprep.subr.bf16.mxu0 0
          %1648 = vmatpush1.bf16.msra.mxu0 %v1546
          %1649 = vmatprep.subr.bf16.mxu0 0
          %1650 = vmatpush1.bf16.msra.mxu0 %v1547
          %1651 = vmatprep.subr.bf16.mxu0 0
          %1652 = vmatpush1.bf16.msra.mxu0 %v1548
          %1653 = vmatprep.mubr.bf16.mxu0 %v1317
          %1654 = vmatmul.mubr.bf16.gmra.mrb[0].mxu0 %v1316
          %v1655 = vpop.f32.mrb[0].mxu0
          %v1656 = vadd.f32 %v1616, %v1655
          %v1657 = vpop.f32.mrb[0].mxu0
          %v1658 = vpop.f32.mrb[0].mxu0
          %v1659 = vpop.f32.mrb[0].mxu0
          %1660 = vdwg.mxu0
          %1661 = vst [vmem:[#allocation9] sm:$0xff] %v1656
        $region60: #{tpu_custom_call.1} parent=39 // pred_fallthru
          _
        // Predicated region
        $region61: #{tpu_custom_call.1} parent=39 // pred_check
          %p1662 = pneg %p170
        $region62: #{tpu_custom_call.1} parent=39 // pred_check_branch
          %1664 = sbr.rel (%p1662) target = $region64
        $region63: #{tpu_custom_call.1} parent=39 // pred_region
          %s1666 = ssub.s32 128, 128
          %1667 = vsyncadd [#allocation5], %s1666
          %s1668 = smul.addr %s27, 128
          %s1669 = scalar_lea.hbm %s5, %s1668
          %s1671 = sshll.u32 [#allocation9], 4
          %s1672 = int_to_ptr.vmem [resolvable:$true] %s1671
          %1674 = dma.vmem_to_hbm [thread:$0]  %s1672, 128, %s1669, [#allocation5]
        $region64: #{tpu_custom_call.1} parent=39 // pred_fallthru
          _
        // Predicated region
        $region65: #{tpu_custom_call.1} parent=39 // pred_check
          %p1675 = pneg %p170
        $region66: #{tpu_custom_call.1} parent=39 // pred_check_branch
          %1677 = sbr.rel (%p1675) target = $region68
        $region67: #{tpu_custom_call.1} parent=39 // pred_region
          %1678 = dma.done [#allocation5], 128
        $region68: #{tpu_custom_call.1} parent=39 // pred_fallthru
          _
      $region40: #{tpu_custom_call.1} parent=5 // pred_fallthru
        _
      %p1679 = scmp.le.s32.totalorder 2, %s18
      // Predicated region
      $region69: #{tpu_custom_call.1} parent=5 // pred_check
        %p1680 = pneg %p1679
      $region70: #{tpu_custom_call.1} parent=5 // pred_check_branch
        %1682 = sbr.rel (%p1680) target = $region72
      $region71: #{tpu_custom_call.1} parent=5 // pred_region
        %s1683 = ssub.s32 %s18, 2
      $region72: #{tpu_custom_call.1} parent=5 // pred_fallthru
        _
    $region6: #{tpu_custom_call.1} parent=1 // loop_footer
      %s22 = sadd.s32 1, %s18
    $region7: #{tpu_custom_call.1} parent=1 // loop_footer_branch
      %17 = sbr.rel target = $region3
    $region8: #{tpu_custom_call.1} parent=1 // loop_exit
      _
    %1684 = vsyncpa [#allocation4], 1
    %s1685 = scalar_lea.sflag [#allocation4], 1
    %1686 = vsyncpa %s1685, 1
    %1687 = vsyncpa [#allocation7], 1
    %s1688 = scalar_lea.sflag [#allocation7], 1
    %1689 = vsyncpa %s1688, 1
    %1690 = vsyncpa [#allocation5], 1
    %s1691 = scalar_lea.sflag [#allocation5], 1
    %1692 = vsyncpa %s1691, 1

</llo_original>
